<compile_context>
chip_gen: v6e
topology: v6e:2x2x1
jax: 0.10.0
libtpu: 0.0.40
codegen_flags: <defaults>
</compile_context>

<pallas_src>
import functools
import math

import jax
import jax.numpy as jnp
from jax.experimental import pallas as pl
from jax.experimental.pallas import tpu as pltpu


# ------------------------------ helpers -------------------------------------

_SQRT_2_OVER_PI = math.sqrt(2.0 / math.pi)
_VMEM_LIMIT = 48 * 1024 * 1024   # headroom over the 32 MiB scoped default,
                                 # still safe on v7x (64 MiB physical VMEM)


def _gelu(x):
    # BERT-style GELU (tanh approximation) — EUP friendly.
    return 0.5 * x * (1.0 + jnp.tanh(_SQRT_2_OVER_PI * (x + 0.044715 * x * x * x)))


def _tile(dim, target, unit):
    """Largest block size <= target that is a multiple of `unit` and divides
    `dim` evenly; falls back to the full dimension (always a legal block)."""
    if dim <= target:
        return dim
    t = (target // unit) * unit
    while t >= unit:
        if dim % t == 0:
            return t
        t -= unit
    return dim


# ------------------------------ dense kernels --------------------------------


def _dense_nok_kernel(x_ref, w_ref, b_ref, o_ref, *, activation):
    """y = act(x @ W + b), whole K in one block.  grid = (M/tm, N/tn)."""
    y = jnp.dot(x_ref[...], w_ref[...], preferred_element_type=jnp.float32)
    y = y + b_ref[...]
    if activation == "gelu":
        y = _gelu(y)
    o_ref[...] = y.astype(o_ref.dtype)


def _dense_kernel(x_ref, w_ref, b_ref, o_ref, acc_ref, *, activation):
    """Tiled y = act(x @ W + b).  grid = (M/tm, N/tn, K/tk).  (Fallback for
    K too large to hold whole — not hit at BERT-base shapes.)"""
    k = pl.program_id(2)

    @pl.when(k == 0)
    def _():
        acc_ref[...] = jnp.zeros_like(acc_ref)

    acc_ref[...] += jnp.dot(x_ref[...], w_ref[...],
                            preferred_element_type=jnp.float32)

    @pl.when(k == pl.num_programs(2) - 1)
    def _():
        y = acc_ref[...] + b_ref[...]
        if activation == "gelu":
            y = _gelu(y)
        o_ref[...] = y.astype(o_ref.dtype)


def _dense_res_ln_nok_kernel(x_ref, w_ref, b_ref, r_ref, g_ref, bb_ref, o_ref,
                             *, eps):
    """y = LayerNorm(x @ W + b + residual), whole K and whole N in one block.
    grid = (M/tm,)."""
    h = jnp.dot(x_ref[...], w_ref[...], preferred_element_type=jnp.float32)
    h = h + b_ref[...] + r_ref[...].astype(jnp.float32)
    mu = jnp.mean(h, axis=-1, keepdims=True)
    diff = h - mu
    var = jnp.mean(diff * diff, axis=-1, keepdims=True)
    inv = jax.lax.rsqrt(var + eps)
    o_ref[...] = (diff * inv * g_ref[...] + bb_ref[...]).astype(o_ref.dtype)


def _dense_res_ln_kernel(x_ref, w_ref, b_ref, r_ref, g_ref, bb_ref,
                         o_ref, acc_ref, *, eps):
    """K-tiled variant of the above.  grid = (M/tm, K/tk)."""
    k = pl.program_id(1)

    @pl.when(k == 0)
    def _():
        acc_ref[...] = jnp.zeros_like(acc_ref)

    acc_ref[...] += jnp.dot(x_ref[...], w_ref[...],
                            preferred_element_type=jnp.float32)

    @pl.when(k == pl.num_programs(1) - 1)
    def _():
        h = acc_ref[...] + b_ref[...] + r_ref[...].astype(jnp.float32)
        mu = jnp.mean(h, axis=-1, keepdims=True)
        diff = h - mu
        var = jnp.mean(diff * diff, axis=-1, keepdims=True)
        inv = jax.lax.rsqrt(var + eps)
        o_ref[...] = (diff * inv * g_ref[...] + bb_ref[...]).astype(o_ref.dtype)


def _ln_kernel(x_ref, g_ref, b_ref, o_ref, *, eps):
    h = x_ref[...].astype(jnp.float32)
    mu = jnp.mean(h, axis=-1, keepdims=True)
    diff = h - mu
    var = jnp.mean(diff * diff, axis=-1, keepdims=True)
    inv = jax.lax.rsqrt(var + eps)
    o_ref[...] = (diff * inv * g_ref[...] + b_ref[...]).astype(o_ref.dtype)


# ------------------------------ attention kernel -----------------------------


def _attn_kernel(q_ref, k_ref, v_ref, mb_ref, o_ref, *,
                 heads, head_dim, q_off, k_off, v_off):
    """One (batch, head-group, query-tile) grid point.
    q_ref : (tq, gw)  Q columns of this head group for this query tile
    k_ref : (S,  gw)  K columns of this head group (full sequence)
    v_ref : (S,  gw)  V columns of this head group (full sequence)
    mb_ref: (1,  S)   additive attention-mask bias (f32)
    o_ref : (tq, gw)  context slab for this head group (lane-dense store)
    The 1/sqrt(head_dim) scale is pre-folded into the Q projection weights.
    Refs are sliced per head (no full-block value loads -> no vreg spills)."""
    mb = mb_ref[...]                                    # (1, S) f32
    outs = []
    for h in range(heads):                              # small static loop (2 at BERT-base)
        lo = h * head_dim
        hi = lo + head_dim
        q = q_ref[:, q_off + lo:q_off + hi]             # (tq, dh) bf16
        k = k_ref[:, k_off + lo:k_off + hi]             # (S, dh)
        v = v_ref[:, v_off + lo:v_off + hi]             # (S, dh)

        s = jnp.einsum('qd,kd->qk', q, k,
                       preferred_element_type=jnp.float32)           # (tq, S)
        s = s + mb
        m = jnp.max(s, axis=-1, keepdims=True)
        p = jnp.exp(s - m)
        denom = jnp.sum(p, axis=-1, keepdims=True)
        p = p * pl.reciprocal(denom, approx=True)
        ctx = jnp.dot(p.astype(v.dtype), v,
                      preferred_element_type=jnp.float32)            # (tq, dh)
        outs.append(ctx.astype(o_ref.dtype))

    # single, full-block-width (>=128-lane at BERT-base) unmasked store
    o_ref[...] = outs[0] if len(outs) == 1 else jnp.concatenate(outs, axis=-1)


# ------------------------------ wrappers ------------------------------------


def dense(x2d, w, b, activation=None, *,
          tm_target=1024, tn_target=1024, tk_target=3072):
    """y = act(x @ W + b), bf16 operands, f32 accumulation."""
    M, K = x2d.shape
    N = w.shape[1]
    tm = _tile(M, tm_target, 8)
    tn = _tile(N, tn_target, 128)
    tk = _tile(K, tk_target, 128)
    cost = pl.CostEstimate(
        flops=2 * M * N * K,
        transcendentals=(M * N if activation == "gelu" else 0),
        bytes_accessed=2 * (M * K + K * N + M * N))
    cparams = pltpu.CompilerParams(
        dimension_semantics=("parallel", "parallel") if tk == K
        else ("parallel", "parallel", "arbitrary"),
        vmem_limit_bytes=_VMEM_LIMIT)

    if tk == K:
        # full K in one block: no accumulator revisit, no init/epilogue guards
        return pl.pallas_call(
            functools.partial(_dense_nok_kernel, activation=activation),
            out_shape=jax.ShapeDtypeStruct((M, N), jnp.bfloat16),
            grid=(M // tm, N // tn),
            in_specs=[pl.BlockSpec((tm, K), lambda i, j: (i, 0)),
                      pl.BlockSpec((K, tn), lambda i, j: (0, j)),
                      pl.BlockSpec((1, tn), lambda i, j: (0, j))],
            out_specs=pl.BlockSpec((tm, tn), lambda i, j: (i, j)),
            compiler_params=cparams,
            cost_estimate=cost,
        )(x2d, w, b.reshape(1, N))

    return pl.pallas_call(
        functools.partial(_dense_kernel, activation=activation),
        out_shape=jax.ShapeDtypeStruct((M, N), jnp.bfloat16),
        grid=(M // tm, N // tn, K // tk),
        in_specs=[pl.BlockSpec((tm, tk), lambda i, j, k: (i, k)),
                  pl.BlockSpec((tk, tn), lambda i, j, k: (k, j)),
                  pl.BlockSpec((1, tn), lambda i, j, k: (0, j))],
        out_specs=pl.BlockSpec((tm, tn), lambda i, j, k: (i, j)),
        scratch_shapes=[pltpu.VMEM((tm, tn), jnp.float32)],
        compiler_params=cparams,
        cost_estimate=cost,
    )(x2d, w, b.reshape(1, N))


def dense_res_ln(x2d, w, b, res2d, gamma, beta, eps=1e-12, *,
                 tm_target=512, tk_target=3072):
    """y = LayerNorm(x @ W + b + res); bias + residual + LN fused as epilogue.
    N (= hidden) is kept whole so the LN reduction lives in one block."""
    M, K = x2d.shape
    N = w.shape[1]
    tm = _tile(M, tm_target, 8)
    tk = _tile(K, tk_target, 128)
    cost = pl.CostEstimate(
        flops=2 * M * N * K + 10 * M * N,
        transcendentals=M,
        bytes_accessed=2 * (M * K + K * N + 2 * M * N))
    cparams = pltpu.CompilerParams(
        dimension_semantics=("parallel",) if tk == K else ("parallel", "arbitrary"),
        vmem_limit_bytes=_VMEM_LIMIT)
    args = (x2d, w, b.reshape(1, N), res2d,
            gamma.reshape(1, N), beta.reshape(1, N))

    if tk == K:
        return pl.pallas_call(
            functools.partial(_dense_res_ln_nok_kernel, eps=eps),
            out_shape=jax.ShapeDtypeStruct((M, N), jnp.bfloat16),
            grid=(M // tm,),
            in_specs=[pl.BlockSpec((tm, K), lambda i: (i, 0)),
                      pl.BlockSpec((K, N), lambda i: (0, 0)),
                      pl.BlockSpec((1, N), lambda i: (0, 0)),
                      pl.BlockSpec((tm, N), lambda i: (i, 0)),
                      pl.BlockSpec((1, N), lambda i: (0, 0)),
                      pl.BlockSpec((1, N), lambda i: (0, 0))],
            out_specs=pl.BlockSpec((tm, N), lambda i: (i, 0)),
            compiler_params=cparams,
            cost_estimate=cost,
        )(*args)

    return pl.pallas_call(
        functools.partial(_dense_res_ln_kernel, eps=eps),
        out_shape=jax.ShapeDtypeStruct((M, N), jnp.bfloat16),
        grid=(M // tm, K // tk),
        in_specs=[pl.BlockSpec((tm, tk), lambda i, k: (i, k)),
                  pl.BlockSpec((tk, N), lambda i, k: (k, 0)),
                  pl.BlockSpec((1, N), lambda i, k: (0, 0)),
                  pl.BlockSpec((tm, N), lambda i, k: (i, 0)),
                  pl.BlockSpec((1, N), lambda i, k: (0, 0)),
                  pl.BlockSpec((1, N), lambda i, k: (0, 0))],
        out_specs=pl.BlockSpec((tm, N), lambda i, k: (i, 0)),
        scratch_shapes=[pltpu.VMEM((tm, N), jnp.float32)],
        compiler_params=cparams,
        cost_estimate=cost,
    )(*args)


def layernorm(x2d, gamma, beta, eps=1e-12, *, tm_target=1024):
    """LN-only kernel for the embedding output (HBM-bandwidth bound)."""
    M, H = x2d.shape
    tm = _tile(M, tm_target, 8)
    return pl.pallas_call(
        functools.partial(_ln_kernel, eps=eps),
        out_shape=jax.ShapeDtypeStruct((M, H), jnp.bfloat16),
        grid=(M // tm,),
        in_specs=[pl.BlockSpec((tm, H), lambda i: (i, 0)),
                  pl.BlockSpec((1, H), lambda i: (0, 0)),
                  pl.BlockSpec((1, H), lambda i: (0, 0))],
        out_specs=pl.BlockSpec((tm, H), lambda i: (i, 0)),
        compiler_params=pltpu.CompilerParams(
            dimension_semantics=("parallel",),
            vmem_limit_bytes=_VMEM_LIMIT),
    )(x2d, gamma.reshape(1, H), beta.reshape(1, H))


def attention(qkv3d, mask_bias, num_heads, head_dim, *, tq_target=512):
    """Self-attention on the fused QKV tensor [B, S, 3H] -> context [B, S, H].
    Grid = (batch, head-group, query-tile); each head group's Q/K/V columns are
    fetched as separate lane-aligned blocks (no unused columns DMA'd).
    K/V blocks are constant across the innermost (query-tile) axis -> fetched
    once per (batch, group)."""
    B, S, threeH = qkv3d.shape
    H = num_heads * head_dim
    tq = _tile(S, tq_target, 8)

    # pack heads so one column block is a multiple of 128 lanes (unmasked vst,
    # 128-aligned DMA).  For BERT-base (dh=64) this is head pairs (gw=128).
    hpg = max(1, min(num_heads, 128 // head_dim)) if head_dim <= 128 else 1
    while num_heads % hpg:
        hpg -= 1
    gw = hpg * head_dim

    if gw % 128 == 0 and H % gw == 0:
        n_groups = num_heads // hpg
        n_qcols = H // gw
        q_spec = pl.BlockSpec((pl.Squeezed(), tq, gw),
                              lambda b, g, qi: (b, qi, g))
        k_spec = pl.BlockSpec((pl.Squeezed(), S, gw),
                              lambda b, g, qi: (b, 0, n_qcols + g))
        v_spec = pl.BlockSpec((pl.Squeezed(), S, gw),
                              lambda b, g, qi: (b, 0, 2 * n_qcols + g))
        o_spec = pl.BlockSpec((pl.Squeezed(), tq, gw),
                              lambda b, g, qi: (b, qi, g))
        offs = (0, 0, 0)
        heads_in_kernel = hpg
    else:
        # tiny-model fallback (column blocks < 128 lanes are not legal tiles):
        # one group covering all heads; kernel slices Q/K/V columns from the
        # full-width refs.  Only used for smoke-test shapes.
        n_groups = 1
        q_spec = pl.BlockSpec((pl.Squeezed(), tq, threeH),
                              lambda b, g, qi: (b, qi, 0))
        k_spec = pl.BlockSpec((pl.Squeezed(), S, threeH),
                              lambda b, g, qi: (b, 0, 0))
        v_spec = k_spec
        o_spec = pl.BlockSpec((pl.Squeezed(), tq, H),
                              lambda b, g, qi: (b, qi, 0))
        offs = (0, H, 2 * H)
        heads_in_kernel = num_heads

    return pl.pallas_call(
        functools.partial(_attn_kernel, heads=heads_in_kernel,
                          head_dim=head_dim,
                          q_off=offs[0], k_off=offs[1], v_off=offs[2]),
        out_shape=jax.ShapeDtypeStruct((B, S, H), jnp.bfloat16),
        grid=(B, n_groups, S // tq),
        in_specs=[q_spec, k_spec, v_spec,
                  pl.BlockSpec((pl.Squeezed(), 1, S),
                               lambda b, g, qi: (b, 0, 0))],
        out_specs=o_spec,
        compiler_params=pltpu.CompilerParams(
            dimension_semantics=("parallel", "parallel", "parallel"),
            vmem_limit_bytes=_VMEM_LIMIT),
        cost_estimate=pl.CostEstimate(
            flops=4 * B * num_heads * S * S * head_dim,
            transcendentals=B * num_heads * S * S,
            bytes_accessed=2 * B * S * (3 * H + H) + 4 * B * S),
    )(qkv3d, qkv3d, qkv3d, mask_bias)


# ------------------------------ model ---------------------------------------


def init_params(key, cfg):
    H, I = cfg['hidden'], cfg['intermediate']
    dh = H // cfg['heads']
    q_scale = 1.0 / math.sqrt(dh)
    bf16 = jnp.bfloat16

    def nrm(k, shape):
        return jax.random.normal(k, shape, jnp.float32) * 0.02

    keys = jax.random.split(key, 4 + cfg['layers'])
    params = {
        'word_emb': nrm(keys[0], (cfg['vocab'], H)),
        'pos_emb': nrm(keys[1], (cfg['max_pos'], H)),
        'tok_emb': nrm(keys[2], (cfg['type_vocab'], H)),
        'emb_ln_g': jnp.ones((H,), jnp.float32),
        'emb_ln_b': jnp.zeros((H,), jnp.float32),
        'layers': [],
    }
    for li in range(cfg['layers']):
        lk = jax.random.split(keys[4 + li], 4)
        # fused Q/K/V projection [H, 3H]; the 1/sqrt(head_dim) attention scale
        # is folded into the Q columns of the weights and bias (semantically
        # identical forward; a loaded checkpoint's Q weight/bias must be
        # scaled the same way).
        qkv_w = nrm(lk[0], (H, 3 * H))
        qkv_w = qkv_w.at[:, :H].multiply(q_scale)
        qkv_b = jnp.zeros((3 * H,), jnp.float32)
        qkv_b = qkv_b.at[:H].multiply(q_scale)
        params['layers'].append({
            'qkv_w': qkv_w.astype(bf16),
            'qkv_b': qkv_b,
            'ao_w': nrm(lk[1], (H, H)).astype(bf16),
            'ao_b': jnp.zeros((H,), jnp.float32),
            'ao_ln_g': jnp.ones((H,), jnp.float32),
            'ao_ln_b': jnp.zeros((H,), jnp.float32),
            'i_w': nrm(lk[2], (H, I)).astype(bf16),
            'i_b': jnp.zeros((I,), jnp.float32),
            'o_w': nrm(lk[3], (I, H)).astype(bf16),
            'o_b': jnp.zeros((H,), jnp.float32),
            'o_ln_g': jnp.ones((H,), jnp.float32),
            'o_ln_b': jnp.zeros((H,), jnp.float32),
        })
    return params


def bert_forward(params, input_ids, token_type_ids, attention_mask, cfg):
    B, S = input_ids.shape
    H = cfg['hidden']
    nH = cfg['heads']
    dh = H // nH
    M = B * S

    # --- embeddings (gathers are XLA glue; normalization in Pallas) ---
    words = jnp.take(params['word_emb'], input_ids, axis=0)           # [B,S,H]
    pos = params['pos_emb'][:S][None, :, :]                           # [1,S,H]
    toks = jnp.take(params['tok_emb'], token_type_ids, axis=0)        # [B,S,H]
    emb = (words + pos + toks).reshape(M, H)
    x = layernorm(emb, params['emb_ln_g'], params['emb_ln_b'])        # bf16

    # --- extended attention mask: (1 - mask) * -10000 ---
    mask_bias = (1.0 - attention_mask.astype(jnp.float32)) * -10000.0
    mask_bias = mask_bias.reshape(B, 1, S)

    for layer in params['layers']:
        # --- self-attention (fused QKV projection, no head transposes) ---
        qkv = dense(x, layer['qkv_w'], layer['qkv_b'])                # [M,3H]
        ctx = attention(qkv.reshape(B, S, 3 * H), mask_bias, nH, dh)  # [B,S,H]
        # output projection with fused bias + residual + LayerNorm epilogue
        x = dense_res_ln(ctx.reshape(M, H), layer['ao_w'], layer['ao_b'],
                         x, layer['ao_ln_g'], layer['ao_ln_b'])

        # --- feed-forward ---
        inter = dense(x, layer['i_w'], layer['i_b'], activation="gelu")
        x = dense_res_ln(inter, layer['o_w'], layer['o_b'],
                         x, layer['o_ln_g'], layer['o_ln_b'])

    # top hidden states (what `Bert.forward` returns)
    return x.reshape(B, S, H).astype(jnp.float32)


# ------------------------------ main -----------------------------------------


if __name__ == "__main__":
    # Small shapes, but with head_dim=64 so the test exercises the same
    # lane-aligned head-pair attention path used at real BERT-base shapes
    # (H=768, heads=12, S=512, I=3072).
    cfg = dict(vocab=100, hidden=128, heads=2, intermediate=256,
               layers=2, max_pos=64, type_vocab=2)

    key = jax.random.PRNGKey(0)
    pkey, xkey = jax.random.split(key)
    params = init_params(pkey, cfg)

    B, S = 2, 8
    input_ids = jax.random.randint(xkey, (B, S), 0, cfg['vocab'],
                                   dtype=jnp.int32)
    segments = jnp.concatenate([jnp.zeros((B, S // 2), jnp.int32),
                                jnp.ones((B, S // 2), jnp.int32)], axis=1)
    mask = jnp.ones((B, S), jnp.int32)

    fwd = jax.jit(functools.partial(bert_forward, cfg=cfg))
    top = fwd(params, input_ids, segments, mask)
    top = jax.block_until_ready(top)

    assert top.shape == (B, S, cfg['hidden'])
    assert jnp.all(jnp.isfinite(top))
    print("KERNEL_OK")
</pallas_src>

<mosaic_0001>
module attributes {stable_mosaic.version = 11 : i64} {
  func.func @_ln_kernel(%arg0: i32, %arg1: memref<16x128xf32, #tpu.memory_space<vmem>>, %arg2: memref<1x128xf32, #tpu.memory_space<vmem>>, %arg3: memref<1x128xf32, #tpu.memory_space<vmem>>, %arg4: memref<16x128xbf16, #tpu.memory_space<vmem>>) attributes {dimension_semantics = [#tpu.dimension_semantics<parallel>], iteration_bounds = array<i64: 1>, scalar_prefetch = 0 : i64, scratch_operands = 0 : i64, tpu.core_type = #tpu.core_type<tc>, window_params = [{transform_indices = @transform_0, window_bounds = array<i64: 16, 128>}, {pipeline_mode = #tpu.pipeline_mode<synchronous>, transform_indices = @transform_1, window_bounds = array<i64: 1, 128>}, {pipeline_mode = #tpu.pipeline_mode<synchronous>, transform_indices = @transform_2, window_bounds = array<i64: 1, 128>}, {transform_indices = @transform_3, window_bounds = array<i64: 16, 128>}]} {
    %c0 = arith.constant 0 : index
    %c0_0 = arith.constant 0 : index
    %0 = vector.load %arg1[%c0, %c0_0] : memref<16x128xf32, #tpu.memory_space<vmem>>, vector<16x128xf32>
    %cst = arith.constant dense<0.000000e+00> : vector<16xf32>
    %1 = vector.multi_reduction <add>, %0, %cst [1] : vector<16x128xf32> to vector<16xf32>
    %2 = vector.shape_cast %1 : vector<16xf32> to vector<16x1xf32>
    %cst_1 = arith.constant 1.280000e+02 : f32
    %3 = vector.broadcast %cst_1 : f32 to vector<16x1xf32>
    %4 = arith.divf %2, %3 : vector<16x1xf32>
    %5 = vector.broadcast %4 : vector<16x1xf32> to vector<16x128xf32>
    %6 = arith.subf %0, %5 : vector<16x128xf32>
    %7 = arith.mulf %6, %6 : vector<16x128xf32>
    %cst_2 = arith.constant dense<0.000000e+00> : vector<16xf32>
    %8 = vector.multi_reduction <add>, %7, %cst_2 [1] : vector<16x128xf32> to vector<16xf32>
    %9 = vector.shape_cast %8 : vector<16xf32> to vector<16x1xf32>
    %cst_3 = arith.constant 1.280000e+02 : f32
    %10 = vector.broadcast %cst_3 : f32 to vector<16x1xf32>
    %11 = arith.divf %9, %10 : vector<16x1xf32>
    %cst_4 = arith.constant 9.99999996E-13 : f32
    %12 = vector.broadcast %cst_4 : f32 to vector<16x1xf32>
    %13 = arith.addf %11, %12 : vector<16x1xf32>
    %14 = math.rsqrt %13 : vector<16x1xf32>
    %15 = vector.broadcast %14 : vector<16x1xf32> to vector<16x128xf32>
    %16 = arith.mulf %6, %15 : vector<16x128xf32>
    %c0_5 = arith.constant 0 : index
    %c0_6 = arith.constant 0 : index
    %17 = vector.load %arg2[%c0_5, %c0_6] : memref<1x128xf32, #tpu.memory_space<vmem>>, vector<1x128xf32>
    %18 = vector.broadcast %17 : vector<1x128xf32> to vector<16x128xf32>
    %19 = arith.mulf %16, %18 : vector<16x128xf32>
    %c0_7 = arith.constant 0 : index
    %c0_8 = arith.constant 0 : index
    %20 = vector.load %arg3[%c0_7, %c0_8] : memref<1x128xf32, #tpu.memory_space<vmem>>, vector<1x128xf32>
    %21 = vector.broadcast %20 : vector<1x128xf32> to vector<16x128xf32>
    %22 = arith.addf %19, %21 : vector<16x128xf32>
    %23 = arith.truncf %22 : vector<16x128xf32> to vector<16x128xbf16>
    %c0_9 = arith.constant 0 : index
    %c0_10 = arith.constant 0 : index
    %24 = vector.load %arg4[%c0_9, %c0_10] : memref<16x128xbf16, #tpu.memory_space<vmem>>, vector<16x128xbf16>
    tpu.vector_store %arg4[%c0_9, %c0_10], %23 {strides = array<i32>} : memref<16x128xbf16, #tpu.memory_space<vmem>>, vector<16x128xbf16>,
    return
  }
  func.func @transform_0(%arg0: i32) -> (i32, i32) {
    %c0_i32 = arith.constant 0 : i32
    %c0_i32_0 = arith.constant 0 : i32
    return %arg0, %c0_i32 : i32, i32
  }
  func.func @transform_1(%arg0: i32) -> (i32, i32) {
    %c0_i32 = arith.constant 0 : i32
    %c0_i32_0 = arith.constant 0 : i32
    %c0_i32_1 = arith.constant 0 : i32
    return %c0_i32, %c0_i32_0 : i32, i32
  }
  func.func @transform_2(%arg0: i32) -> (i32, i32) {
    %c0_i32 = arith.constant 0 : i32
    %c0_i32_0 = arith.constant 0 : i32
    %c0_i32_1 = arith.constant 0 : i32
    return %c0_i32, %c0_i32_0 : i32, i32
  }
  func.func @transform_3(%arg0: i32) -> (i32, i32) {
    %c0_i32 = arith.constant 0 : i32
    %c0_i32_0 = arith.constant 0 : i32
    return %arg0, %c0_i32 : i32, i32
  }
}

module attributes {stable_mosaic.version = 11 : i64} {
  func.func @_dense_nok_kernel(%arg0: i32, %arg1: i32, %arg2: memref<16x128xbf16, #tpu.memory_space<vmem>>, %arg3: memref<128x384xbf16, #tpu.memory_space<vmem>>, %arg4: memref<1x384xf32, #tpu.memory_space<vmem>>, %arg5: memref<16x384xbf16, #tpu.memory_space<vmem>>) attributes {dimension_semantics = [#tpu.dimension_semantics<parallel>, #tpu.dimension_semantics<parallel>], iteration_bounds = array<i64: 1, 1>, scalar_prefetch = 0 : i64, scratch_operands = 0 : i64, tpu.core_type = #tpu.core_type<tc>, window_params = [{transform_indices = @transform_0, window_bounds = array<i64: 16, 128>}, {transform_indices = @transform_1, window_bounds = array<i64: 128, 384>}, {transform_indices = @transform_2, window_bounds = array<i64: 1, 384>}, {transform_indices = @transform_3, window_bounds = array<i64: 16, 384>}]} {
    %c0 = arith.constant 0 : index
    %c0_0 = arith.constant 0 : index
    %0 = vector.load %arg2[%c0, %c0_0] : memref<16x128xbf16, #tpu.memory_space<vmem>>, vector<16x128xbf16>
    %c0_1 = arith.constant 0 : index
    %c0_2 = arith.constant 0 : index
    %1 = vector.load %arg3[%c0_1, %c0_2] : memref<128x384xbf16, #tpu.memory_space<vmem>>, vector<128x384xbf16>
    %cst = arith.constant dense<0.000000e+00> : vector<16x384xf32>
    %2 = tpu.matmul %0, %1, %cst {dimension_numbers = #tpu.dot_dimension_numbers<[1], [0], [0], [1], [0, 0, 1, 1], [], []>} : vector<16x128xbf16>, vector<128x384xbf16>, vector<16x384xf32> -> vector<16x384xf32>
    %c0_3 = arith.constant 0 : index
    %c0_4 = arith.constant 0 : index
    %3 = vector.load %arg4[%c0_3, %c0_4] : memref<1x384xf32, #tpu.memory_space<vmem>>, vector<1x384xf32>
    %4 = vector.broadcast %3 : vector<1x384xf32> to vector<16x384xf32>
    %5 = arith.addf %2, %4 : vector<16x384xf32>
    %6 = arith.truncf %5 : vector<16x384xf32> to vector<16x384xbf16>
    %c0_5 = arith.constant 0 : index
    %c0_6 = arith.constant 0 : index
    %7 = vector.load %arg5[%c0_5, %c0_6] : memref<16x384xbf16, #tpu.memory_space<vmem>>, vector<16x384xbf16>
    tpu.vector_store %arg5[%c0_5, %c0_6], %6 {strides = array<i32>} : memref<16x384xbf16, #tpu.memory_space<vmem>>, vector<16x384xbf16>,
    return
  }
  func.func @transform_0(%arg0: i32, %arg1: i32) -> (i32, i32) {
    %c0_i32 = arith.constant 0 : i32
    %c0_i32_0 = arith.constant 0 : i32
    return %arg0, %c0_i32 : i32, i32
  }
  func.func @transform_1(%arg0: i32, %arg1: i32) -> (i32, i32) {
    %c0_i32 = arith.constant 0 : i32
    %c0_i32_0 = arith.constant 0 : i32
    return %c0_i32, %arg1 : i32, i32
  }
  func.func @transform_2(%arg0: i32, %arg1: i32) -> (i32, i32) {
    %c0_i32 = arith.constant 0 : i32
    %c0_i32_0 = arith.constant 0 : i32
    return %c0_i32, %arg1 : i32, i32
  }
  func.func @transform_3(%arg0: i32, %arg1: i32) -> (i32, i32) {
    %c0_i32 = arith.constant 0 : i32
    return %arg0, %arg1 : i32, i32
  }
}

module attributes {stable_mosaic.version = 11 : i64} {
  func.func @_attn_kernel(%arg0: i32, %arg1: i32, %arg2: i32, %arg3: memref<1x8x128xbf16, #tpu.memory_space<vmem>>, %arg4: memref<1x8x128xbf16, #tpu.memory_space<vmem>>, %arg5: memref<1x8x128xbf16, #tpu.memory_space<vmem>>, %arg6: memref<1x1x8xf32, #tpu.memory_space<vmem>>, %arg7: memref<1x8x128xbf16, #tpu.memory_space<vmem>>) attributes {dimension_semantics = [#tpu.dimension_semantics<parallel>, #tpu.dimension_semantics<parallel>, #tpu.dimension_semantics<parallel>], iteration_bounds = array<i64: 2, 1, 1>, scalar_prefetch = 0 : i64, scratch_operands = 0 : i64, tpu.core_type = #tpu.core_type<tc>, window_params = [{transform_indices = @transform_0, window_bounds = array<i64: 1, 8, 128>}, {transform_indices = @transform_1, window_bounds = array<i64: 1, 8, 128>}, {transform_indices = @transform_2, window_bounds = array<i64: 1, 8, 128>}, {transform_indices = @transform_3, window_bounds = array<i64: 1, 1, 8>}, {transform_indices = @transform_4, window_bounds = array<i64: 1, 8, 128>}]} {
    %c0 = arith.constant 0 : index
    %c0_0 = arith.constant 0 : index
    %c0_1 = arith.constant 0 : index
    %0 = vector.load %arg6[%c0, %c0_0, %c0_1] : memref<1x1x8xf32, #tpu.memory_space<vmem>>, vector<1x1x8xf32>
    %1 = vector.shape_cast %0 : vector<1x1x8xf32> to vector<1x8xf32>
    %c0_2 = arith.constant 0 : index
    %c0_3 = arith.constant 0 : index
    %c0_4 = arith.constant 0 : index
    %2 = vector.load %arg3[%c0_2, %c0_3, %c0_4] : memref<1x8x128xbf16, #tpu.memory_space<vmem>>, vector<1x8x64xbf16>
    %3 = vector.shape_cast %2 : vector<1x8x64xbf16> to vector<8x64xbf16>
    %c0_5 = arith.constant 0 : index
    %c0_6 = arith.constant 0 : index
    %c0_7 = arith.constant 0 : index
    %4 = vector.load %arg4[%c0_5, %c0_6, %c0_7] : memref<1x8x128xbf16, #tpu.memory_space<vmem>>, vector<1x8x64xbf16>
    %5 = vector.shape_cast %4 : vector<1x8x64xbf16> to vector<8x64xbf16>
    %c0_8 = arith.constant 0 : index
    %c0_9 = arith.constant 0 : index
    %c0_10 = arith.constant 0 : index
    %6 = vector.load %arg5[%c0_8, %c0_9, %c0_10] : memref<1x8x128xbf16, #tpu.memory_space<vmem>>, vector<1x8x64xbf16>
    %7 = vector.shape_cast %6 : vector<1x8x64xbf16> to vector<8x64xbf16>
    "tpu.trace_start"() <{level = 10 : i32, message = "qd,kd->qk"}> : () -> ()
    %cst = arith.constant dense<0.000000e+00> : vector<8x8xf32>
    %8 = tpu.matmul %3, %5, %cst {dimension_numbers = #tpu.dot_dimension_numbers<[1], [1], [0], [0], [0, 0, 1, 0], [], []>} : vector<8x64xbf16>, vector<8x64xbf16>, vector<8x8xf32> -> vector<8x8xf32>
    "tpu.trace_stop"() : () -> ()
    %9 = vector.broadcast %1 : vector<1x8xf32> to vector<8x8xf32>
    %10 = arith.addf %8, %9 : vector<8x8xf32>
    %cst_11 = arith.constant dense<0xFF800000> : vector<8xf32>
    %11 = vector.multi_reduction <maximumf>, %10, %cst_11 [1] : vector<8x8xf32> to vector<8xf32>
    %12 = vector.shape_cast %11 : vector<8xf32> to vector<8x1xf32>
    %13 = vector.broadcast %12 : vector<8x1xf32> to vector<8x8xf32>
    %14 = arith.subf %10, %13 : vector<8x8xf32>
    %15 = math.exp %14 : vector<8x8xf32>
    %cst_12 = arith.constant dense<0.000000e+00> : vector<8xf32>
    %16 = vector.multi_reduction <add>, %15, %cst_12 [1] : vector<8x8xf32> to vector<8xf32>
    %17 = vector.shape_cast %16 : vector<8xf32> to vector<8x1xf32>
    %18 = tpu.reciprocal %17 {approx = true} : vector<8x1xf32> -> vector<8x1xf32>
    %19 = vector.broadcast %18 : vector<8x1xf32> to vector<8x8xf32>
    %20 = arith.mulf %15, %19 : vector<8x8xf32>
    %21 = arith.truncf %20 : vector<8x8xf32> to vector<8x8xbf16>
    %cst_13 = arith.constant dense<0.000000e+00> : vector<8x64xf32>
    %22 = tpu.matmul %21, %7, %cst_13 {dimension_numbers = #tpu.dot_dimension_numbers<[1], [0], [0], [1], [0, 0, 1, 1], [], []>} : vector<8x8xbf16>, vector<8x64xbf16>, vector<8x64xf32> -> vector<8x64xf32>
    %23 = arith.truncf %22 : vector<8x64xf32> to vector<8x64xbf16>
    %c0_14 = arith.constant 0 : index
    %c0_15 = arith.constant 0 : index
    %c64 = arith.constant 64 : index
    %24 = vector.load %arg3[%c0_14, %c0_15, %c64] : memref<1x8x128xbf16, #tpu.memory_space<vmem>>, vector<1x8x64xbf16>
    %25 = vector.shape_cast %24 : vector<1x8x64xbf16> to vector<8x64xbf16>
    %c0_16 = arith.constant 0 : index
    %c0_17 = arith.constant 0 : index
    %c64_18 = arith.constant 64 : index
    %26 = vector.load %arg4[%c0_16, %c0_17, %c64_18] : memref<1x8x128xbf16, #tpu.memory_space<vmem>>, vector<1x8x64xbf16>
    %27 = vector.shape_cast %26 : vector<1x8x64xbf16> to vector<8x64xbf16>
    %c0_19 = arith.constant 0 : index
    %c0_20 = arith.constant 0 : index
    %c64_21 = arith.constant 64 : index
    %28 = vector.load %arg5[%c0_19, %c0_20, %c64_21] : memref<1x8x128xbf16, #tpu.memory_space<vmem>>, vector<1x8x64xbf16>
    %29 = vector.shape_cast %28 : vector<1x8x64xbf16> to vector<8x64xbf16>
    "tpu.trace_start"() <{level = 10 : i32, message = "qd,kd->qk"}> : () -> ()
    %cst_22 = arith.constant dense<0.000000e+00> : vector<8x8xf32>
    %30 = tpu.matmul %25, %27, %cst_22 {dimension_numbers = #tpu.dot_dimension_numbers<[1], [1], [0], [0], [0, 0, 1, 0], [], []>} : vector<8x64xbf16>, vector<8x64xbf16>, vector<8x8xf32> -> vector<8x8xf32>
    "tpu.trace_stop"() : () -> ()
    %31 = vector.broadcast %1 : vector<1x8xf32> to vector<8x8xf32>
    %32 = arith.addf %30, %31 : vector<8x8xf32>
    %cst_23 = arith.constant dense<0xFF800000> : vector<8xf32>
    %33 = vector.multi_reduction <maximumf>, %32, %cst_23 [1] : vector<8x8xf32> to vector<8xf32>
    %34 = vector.shape_cast %33 : vector<8xf32> to vector<8x1xf32>
    %35 = vector.broadcast %34 : vector<8x1xf32> to vector<8x8xf32>
    %36 = arith.subf %32, %35 : vector<8x8xf32>
    %37 = math.exp %36 : vector<8x8xf32>
    %cst_24 = arith.constant dense<0.000000e+00> : vector<8xf32>
    %38 = vector.multi_reduction <add>, %37, %cst_24 [1] : vector<8x8xf32> to vector<8xf32>
    %39 = vector.shape_cast %38 : vector<8xf32> to vector<8x1xf32>
    %40 = tpu.reciprocal %39 {approx = true} : vector<8x1xf32> -> vector<8x1xf32>
    %41 = vector.broadcast %40 : vector<8x1xf32> to vector<8x8xf32>
    %42 = arith.mulf %37, %41 : vector<8x8xf32>
    %43 = arith.truncf %42 : vector<8x8xf32> to vector<8x8xbf16>
    %cst_25 = arith.constant dense<0.000000e+00> : vector<8x64xf32>
    %44 = tpu.matmul %43, %29, %cst_25 {dimension_numbers = #tpu.dot_dimension_numbers<[1], [0], [0], [1], [0, 0, 1, 1], [], []>} : vector<8x8xbf16>, vector<8x64xbf16>, vector<8x64xf32> -> vector<8x64xf32>
    %45 = arith.truncf %44 : vector<8x64xf32> to vector<8x64xbf16>
    %46 = tpu.concatenate %23, %45 in 1 : vector<8x64xbf16>, vector<8x64xbf16> -> vector<8x128xbf16>
    %c0_26 = arith.constant 0 : index
    %c0_27 = arith.constant 0 : index
    %c0_28 = arith.constant 0 : index
    %47 = vector.load %arg7[%c0_26, %c0_27, %c0_28] : memref<1x8x128xbf16, #tpu.memory_space<vmem>>, vector<1x8x128xbf16>
    %48 = vector.shape_cast %47 : vector<1x8x128xbf16> to vector<8x128xbf16>
    %49 = vector.shape_cast %46 : vector<8x128xbf16> to vector<1x8x128xbf16>
    tpu.vector_store %arg7[%c0_26, %c0_27, %c0_28], %49 {strides = array<i32>} : memref<1x8x128xbf16, #tpu.memory_space<vmem>>, vector<1x8x128xbf16>,
    return
  }
  func.func @transform_0(%arg0: i32, %arg1: i32, %arg2: i32) -> (i32, i32, i32) {
    %c0_i32 = arith.constant 0 : i32
    return %arg0, %arg2, %arg1 : i32, i32, i32
  }
  func.func @transform_1(%arg0: i32, %arg1: i32, %arg2: i32) -> (i32, i32, i32) {
    %c1_i32 = arith.constant 1 : i32
    %0 = arith.addi %c1_i32, %arg1 : i32
    %c0_i32 = arith.constant 0 : i32
    %c0_i32_0 = arith.constant 0 : i32
    return %arg0, %c0_i32, %0 : i32, i32, i32
  }
  func.func @transform_2(%arg0: i32, %arg1: i32, %arg2: i32) -> (i32, i32, i32) {
    %c2_i32 = arith.constant 2 : i32
    %0 = arith.addi %c2_i32, %arg1 : i32
    %c0_i32 = arith.constant 0 : i32
    %c0_i32_0 = arith.constant 0 : i32
    return %arg0, %c0_i32, %0 : i32, i32, i32
  }
  func.func @transform_3(%arg0: i32, %arg1: i32, %arg2: i32) -> (i32, i32, i32) {
    %c0_i32 = arith.constant 0 : i32
    %c0_i32_0 = arith.constant 0 : i32
    %c0_i32_1 = arith.constant 0 : i32
    return %arg0, %c0_i32, %c0_i32_0 : i32, i32, i32
  }
  func.func @transform_4(%arg0: i32, %arg1: i32, %arg2: i32) -> (i32, i32, i32) {
    %c0_i32 = arith.constant 0 : i32
    return %arg0, %arg2, %arg1 : i32, i32, i32
  }
}

module attributes {stable_mosaic.version = 11 : i64} {
  func.func @_dense_res_ln_nok_kernel(%arg0: i32, %arg1: memref<16x128xbf16, #tpu.memory_space<vmem>>, %arg2: memref<128x128xbf16, #tpu.memory_space<vmem>>, %arg3: memref<1x128xf32, #tpu.memory_space<vmem>>, %arg4: memref<16x128xbf16, #tpu.memory_space<vmem>>, %arg5: memref<1x128xf32, #tpu.memory_space<vmem>>, %arg6: memref<1x128xf32, #tpu.memory_space<vmem>>, %arg7: memref<16x128xbf16, #tpu.memory_space<vmem>>) attributes {dimension_semantics = [#tpu.dimension_semantics<parallel>], iteration_bounds = array<i64: 1>, scalar_prefetch = 0 : i64, scratch_operands = 0 : i64, tpu.core_type = #tpu.core_type<tc>, window_params = [{transform_indices = @transform_0, window_bounds = array<i64: 16, 128>}, {pipeline_mode = #tpu.pipeline_mode<synchronous>, transform_indices = @transform_1, window_bounds = array<i64: 128, 128>}, {pipeline_mode = #tpu.pipeline_mode<synchronous>, transform_indices = @transform_2, window_bounds = array<i64: 1, 128>}, {transform_indices = @transform_3, window_bounds = array<i64: 16, 128>}, {pipeline_mode = #tpu.pipeline_mode<synchronous>, transform_indices = @transform_4, window_bounds = array<i64: 1, 128>}, {pipeline_mode = #tpu.pipeline_mode<synchronous>, transform_indices = @transform_5, window_bounds = array<i64: 1, 128>}, {transform_indices = @transform_6, window_bounds = array<i64: 16, 128>}]} {
    %c0 = arith.constant 0 : index
    %c0_0 = arith.constant 0 : index
    %0 = vector.load %arg1[%c0, %c0_0] : memref<16x128xbf16, #tpu.memory_space<vmem>>, vector<16x128xbf16>
    %c0_1 = arith.constant 0 : index
    %c0_2 = arith.constant 0 : index
    %1 = vector.load %arg2[%c0_1, %c0_2] : memref<128x128xbf16, #tpu.memory_space<vmem>>, vector<128x128xbf16>
    %cst = arith.constant dense<0.000000e+00> : vector<16x128xf32>
    %2 = tpu.matmul %0, %1, %cst {dimension_numbers = #tpu.dot_dimension_numbers<[1], [0], [0], [1], [0, 0, 1, 1], [], []>} : vector<16x128xbf16>, vector<128x128xbf16>, vector<16x128xf32> -> vector<16x128xf32>
    %c0_3 = arith.constant 0 : index
    %c0_4 = arith.constant 0 : index
    %3 = vector.load %arg3[%c0_3, %c0_4] : memref<1x128xf32, #tpu.memory_space<vmem>>, vector<1x128xf32>
    %4 = vector.broadcast %3 : vector<1x128xf32> to vector<16x128xf32>
    %5 = arith.addf %2, %4 : vector<16x128xf32>
    %c0_5 = arith.constant 0 : index
    %c0_6 = arith.constant 0 : index
    %6 = vector.load %arg4[%c0_5, %c0_6] : memref<16x128xbf16, #tpu.memory_space<vmem>>, vector<16x128xbf16>
    %7 = arith.extf %6 : vector<16x128xbf16> to vector<16x128xf32>
    %8 = arith.addf %5, %7 : vector<16x128xf32>
    %cst_7 = arith.constant dense<0.000000e+00> : vector<16xf32>
    %9 = vector.multi_reduction <add>, %8, %cst_7 [1] : vector<16x128xf32> to vector<16xf32>
    %10 = vector.shape_cast %9 : vector<16xf32> to vector<16x1xf32>
    %cst_8 = arith.constant 1.280000e+02 : f32
    %11 = vector.broadcast %cst_8 : f32 to vector<16x1xf32>
    %12 = arith.divf %10, %11 : vector<16x1xf32>
    %13 = vector.broadcast %12 : vector<16x1xf32> to vector<16x128xf32>
    %14 = arith.subf %8, %13 : vector<16x128xf32>
    %15 = arith.mulf %14, %14 : vector<16x128xf32>
    %cst_9 = arith.constant dense<0.000000e+00> : vector<16xf32>
    %16 = vector.multi_reduction <add>, %15, %cst_9 [1] : vector<16x128xf32> to vector<16xf32>
    %17 = vector.shape_cast %16 : vector<16xf32> to vector<16x1xf32>
    %cst_10 = arith.constant 1.280000e+02 : f32
    %18 = vector.broadcast %cst_10 : f32 to vector<16x1xf32>
    %19 = arith.divf %17, %18 : vector<16x1xf32>
    %cst_11 = arith.constant 9.99999996E-13 : f32
    %20 = vector.broadcast %cst_11 : f32 to vector<16x1xf32>
    %21 = arith.addf %19, %20 : vector<16x1xf32>
    %22 = math.rsqrt %21 : vector<16x1xf32>
    %23 = vector.broadcast %22 : vector<16x1xf32> to vector<16x128xf32>
    %24 = arith.mulf %14, %23 : vector<16x128xf32>
    %c0_12 = arith.constant 0 : index
    %c0_13 = arith.constant 0 : index
    %25 = vector.load %arg5[%c0_12, %c0_13] : memref<1x128xf32, #tpu.memory_space<vmem>>, vector<1x128xf32>
    %26 = vector.broadcast %25 : vector<1x128xf32> to vector<16x128xf32>
    %27 = arith.mulf %24, %26 : vector<16x128xf32>
    %c0_14 = arith.constant 0 : index
    %c0_15 = arith.constant 0 : index
    %28 = vector.load %arg6[%c0_14, %c0_15] : memref<1x128xf32, #tpu.memory_space<vmem>>, vector<1x128xf32>
    %29 = vector.broadcast %28 : vector<1x128xf32> to vector<16x128xf32>
    %30 = arith.addf %27, %29 : vector<16x128xf32>
    %31 = arith.truncf %30 : vector<16x128xf32> to vector<16x128xbf16>
    %c0_16 = arith.constant 0 : index
    %c0_17 = arith.constant 0 : index
    %32 = vector.load %arg7[%c0_16, %c0_17] : memref<16x128xbf16, #tpu.memory_space<vmem>>, vector<16x128xbf16>
    tpu.vector_store %arg7[%c0_16, %c0_17], %31 {strides = array<i32>} : memref<16x128xbf16, #tpu.memory_space<vmem>>, vector<16x128xbf16>,
    return
  }
  func.func @transform_0(%arg0: i32) -> (i32, i32) {
    %c0_i32 = arith.constant 0 : i32
    %c0_i32_0 = arith.constant 0 : i32
    return %arg0, %c0_i32 : i32, i32
  }
  func.func @transform_1(%arg0: i32) -> (i32, i32) {
    %c0_i32 = arith.constant 0 : i32
    %c0_i32_0 = arith.constant 0 : i32
    %c0_i32_1 = arith.constant 0 : i32
    return %c0_i32, %c0_i32_0 : i32, i32
  }
  func.func @transform_2(%arg0: i32) -> (i32, i32) {
    %c0_i32 = arith.constant 0 : i32
    %c0_i32_0 = arith.constant 0 : i32
    %c0_i32_1 = arith.constant 0 : i32
    return %c0_i32, %c0_i32_0 : i32, i32
  }
  func.func @transform_3(%arg0: i32) -> (i32, i32) {
    %c0_i32 = arith.constant 0 : i32
    %c0_i32_0 = arith.constant 0 : i32
    return %arg0, %c0_i32 : i32, i32
  }
  func.func @transform_4(%arg0: i32) -> (i32, i32) {
    %c0_i32 = arith.constant 0 : i32
    %c0_i32_0 = arith.constant 0 : i32
    %c0_i32_1 = arith.constant 0 : i32
    return %c0_i32, %c0_i32_0 : i32, i32
  }
  func.func @transform_5(%arg0: i32) -> (i32, i32) {
    %c0_i32 = arith.constant 0 : i32
    %c0_i32_0 = arith.constant 0 : i32
    %c0_i32_1 = arith.constant 0 : i32
    return %c0_i32, %c0_i32_0 : i32, i32
  }
  func.func @transform_6(%arg0: i32) -> (i32, i32) {
    %c0_i32 = arith.constant 0 : i32
    %c0_i32_0 = arith.constant 0 : i32
    return %arg0, %c0_i32 : i32, i32
  }
}

module attributes {stable_mosaic.version = 11 : i64} {
  func.func @_dense_nok_kernel(%arg0: i32, %arg1: i32, %arg2: memref<16x128xbf16, #tpu.memory_space<vmem>>, %arg3: memref<128x256xbf16, #tpu.memory_space<vmem>>, %arg4: memref<1x256xf32, #tpu.memory_space<vmem>>, %arg5: memref<16x256xbf16, #tpu.memory_space<vmem>>) attributes {dimension_semantics = [#tpu.dimension_semantics<parallel>, #tpu.dimension_semantics<parallel>], iteration_bounds = array<i64: 1, 1>, scalar_prefetch = 0 : i64, scratch_operands = 0 : i64, tpu.core_type = #tpu.core_type<tc>, window_params = [{transform_indices = @transform_0, window_bounds = array<i64: 16, 128>}, {transform_indices = @transform_1, window_bounds = array<i64: 128, 256>}, {transform_indices = @transform_2, window_bounds = array<i64: 1, 256>}, {transform_indices = @transform_3, window_bounds = array<i64: 16, 256>}]} {
    %c0 = arith.constant 0 : index
    %c0_0 = arith.constant 0 : index
    %0 = vector.load %arg2[%c0, %c0_0] : memref<16x128xbf16, #tpu.memory_space<vmem>>, vector<16x128xbf16>
    %c0_1 = arith.constant 0 : index
    %c0_2 = arith.constant 0 : index
    %1 = vector.load %arg3[%c0_1, %c0_2] : memref<128x256xbf16, #tpu.memory_space<vmem>>, vector<128x256xbf16>
    %cst = arith.constant dense<0.000000e+00> : vector<16x256xf32>
    %2 = tpu.matmul %0, %1, %cst {dimension_numbers = #tpu.dot_dimension_numbers<[1], [0], [0], [1], [0, 0, 1, 1], [], []>} : vector<16x128xbf16>, vector<128x256xbf16>, vector<16x256xf32> -> vector<16x256xf32>
    %c0_3 = arith.constant 0 : index
    %c0_4 = arith.constant 0 : index
    %3 = vector.load %arg4[%c0_3, %c0_4] : memref<1x256xf32, #tpu.memory_space<vmem>>, vector<1x256xf32>
    %4 = vector.broadcast %3 : vector<1x256xf32> to vector<16x256xf32>
    %5 = arith.addf %2, %4 : vector<16x256xf32>
    %cst_5 = arith.constant 5.000000e-01 : f32
    %6 = vector.broadcast %cst_5 : f32 to vector<16x256xf32>
    %7 = arith.mulf %6, %5 : vector<16x256xf32>
    %cst_6 = arith.constant 4.471500e-02 : f32
    %8 = vector.broadcast %cst_6 : f32 to vector<16x256xf32>
    %9 = arith.mulf %8, %5 : vector<16x256xf32>
    %10 = arith.mulf %9, %5 : vector<16x256xf32>
    %11 = arith.mulf %10, %5 : vector<16x256xf32>
    %12 = arith.addf %5, %11 : vector<16x256xf32>
    %cst_7 = arith.constant 0.797884583 : f32
    %13 = vector.broadcast %cst_7 : f32 to vector<16x256xf32>
    %14 = arith.mulf %13, %12 : vector<16x256xf32>
    %15 = math.tanh %14 : vector<16x256xf32>
    %cst_8 = arith.constant 1.000000e+00 : f32
    %16 = vector.broadcast %cst_8 : f32 to vector<16x256xf32>
    %17 = arith.addf %16, %15 : vector<16x256xf32>
    %18 = arith.mulf %7, %17 : vector<16x256xf32>
    %19 = arith.truncf %18 : vector<16x256xf32> to vector<16x256xbf16>
    %c0_9 = arith.constant 0 : index
    %c0_10 = arith.constant 0 : index
    %20 = vector.load %arg5[%c0_9, %c0_10] : memref<16x256xbf16, #tpu.memory_space<vmem>>, vector<16x256xbf16>
    tpu.vector_store %arg5[%c0_9, %c0_10], %19 {strides = array<i32>} : memref<16x256xbf16, #tpu.memory_space<vmem>>, vector<16x256xbf16>,
    return
  }
  func.func @transform_0(%arg0: i32, %arg1: i32) -> (i32, i32) {
    %c0_i32 = arith.constant 0 : i32
    %c0_i32_0 = arith.constant 0 : i32
    return %arg0, %c0_i32 : i32, i32
  }
  func.func @transform_1(%arg0: i32, %arg1: i32) -> (i32, i32) {
    %c0_i32 = arith.constant 0 : i32
    %c0_i32_0 = arith.constant 0 : i32
    return %c0_i32, %arg1 : i32, i32
  }
  func.func @transform_2(%arg0: i32, %arg1: i32) -> (i32, i32) {
    %c0_i32 = arith.constant 0 : i32
    %c0_i32_0 = arith.constant 0 : i32
    return %c0_i32, %arg1 : i32, i32
  }
  func.func @transform_3(%arg0: i32, %arg1: i32) -> (i32, i32) {
    %c0_i32 = arith.constant 0 : i32
    return %arg0, %arg1 : i32, i32
  }
}

module attributes {stable_mosaic.version = 11 : i64} {
  func.func @_dense_res_ln_nok_kernel(%arg0: i32, %arg1: memref<16x256xbf16, #tpu.memory_space<vmem>>, %arg2: memref<256x128xbf16, #tpu.memory_space<vmem>>, %arg3: memref<1x128xf32, #tpu.memory_space<vmem>>, %arg4: memref<16x128xbf16, #tpu.memory_space<vmem>>, %arg5: memref<1x128xf32, #tpu.memory_space<vmem>>, %arg6: memref<1x128xf32, #tpu.memory_space<vmem>>, %arg7: memref<16x128xbf16, #tpu.memory_space<vmem>>) attributes {dimension_semantics = [#tpu.dimension_semantics<parallel>], iteration_bounds = array<i64: 1>, scalar_prefetch = 0 : i64, scratch_operands = 0 : i64, tpu.core_type = #tpu.core_type<tc>, window_params = [{transform_indices = @transform_0, window_bounds = array<i64: 16, 256>}, {pipeline_mode = #tpu.pipeline_mode<synchronous>, transform_indices = @transform_1, window_bounds = array<i64: 256, 128>}, {pipeline_mode = #tpu.pipeline_mode<synchronous>, transform_indices = @transform_2, window_bounds = array<i64: 1, 128>}, {transform_indices = @transform_3, window_bounds = array<i64: 16, 128>}, {pipeline_mode = #tpu.pipeline_mode<synchronous>, transform_indices = @transform_4, window_bounds = array<i64: 1, 128>}, {pipeline_mode = #tpu.pipeline_mode<synchronous>, transform_indices = @transform_5, window_bounds = array<i64: 1, 128>}, {transform_indices = @transform_6, window_bounds = array<i64: 16, 128>}]} {
    %c0 = arith.constant 0 : index
    %c0_0 = arith.constant 0 : index
    %0 = vector.load %arg1[%c0, %c0_0] : memref<16x256xbf16, #tpu.memory_space<vmem>>, vector<16x256xbf16>
    %c0_1 = arith.constant 0 : index
    %c0_2 = arith.constant 0 : index
    %1 = vector.load %arg2[%c0_1, %c0_2] : memref<256x128xbf16, #tpu.memory_space<vmem>>, vector<256x128xbf16>
    %cst = arith.constant dense<0.000000e+00> : vector<16x128xf32>
    %2 = tpu.matmul %0, %1, %cst {dimension_numbers = #tpu.dot_dimension_numbers<[1], [0], [0], [1], [0, 0, 1, 1], [], []>} : vector<16x256xbf16>, vector<256x128xbf16>, vector<16x128xf32> -> vector<16x128xf32>
    %c0_3 = arith.constant 0 : index
    %c0_4 = arith.constant 0 : index
    %3 = vector.load %arg3[%c0_3, %c0_4] : memref<1x128xf32, #tpu.memory_space<vmem>>, vector<1x128xf32>
    %4 = vector.broadcast %3 : vector<1x128xf32> to vector<16x128xf32>
    %5 = arith.addf %2, %4 : vector<16x128xf32>
    %c0_5 = arith.constant 0 : index
    %c0_6 = arith.constant 0 : index
    %6 = vector.load %arg4[%c0_5, %c0_6] : memref<16x128xbf16, #tpu.memory_space<vmem>>, vector<16x128xbf16>
    %7 = arith.extf %6 : vector<16x128xbf16> to vector<16x128xf32>
    %8 = arith.addf %5, %7 : vector<16x128xf32>
    %cst_7 = arith.constant dense<0.000000e+00> : vector<16xf32>
    %9 = vector.multi_reduction <add>, %8, %cst_7 [1] : vector<16x128xf32> to vector<16xf32>
    %10 = vector.shape_cast %9 : vector<16xf32> to vector<16x1xf32>
    %cst_8 = arith.constant 1.280000e+02 : f32
    %11 = vector.broadcast %cst_8 : f32 to vector<16x1xf32>
    %12 = arith.divf %10, %11 : vector<16x1xf32>
    %13 = vector.broadcast %12 : vector<16x1xf32> to vector<16x128xf32>
    %14 = arith.subf %8, %13 : vector<16x128xf32>
    %15 = arith.mulf %14, %14 : vector<16x128xf32>
    %cst_9 = arith.constant dense<0.000000e+00> : vector<16xf32>
    %16 = vector.multi_reduction <add>, %15, %cst_9 [1] : vector<16x128xf32> to vector<16xf32>
    %17 = vector.shape_cast %16 : vector<16xf32> to vector<16x1xf32>
    %cst_10 = arith.constant 1.280000e+02 : f32
    %18 = vector.broadcast %cst_10 : f32 to vector<16x1xf32>
    %19 = arith.divf %17, %18 : vector<16x1xf32>
    %cst_11 = arith.constant 9.99999996E-13 : f32
    %20 = vector.broadcast %cst_11 : f32 to vector<16x1xf32>
    %21 = arith.addf %19, %20 : vector<16x1xf32>
    %22 = math.rsqrt %21 : vector<16x1xf32>
    %23 = vector.broadcast %22 : vector<16x1xf32> to vector<16x128xf32>
    %24 = arith.mulf %14, %23 : vector<16x128xf32>
    %c0_12 = arith.constant 0 : index
    %c0_13 = arith.constant 0 : index
    %25 = vector.load %arg5[%c0_12, %c0_13] : memref<1x128xf32, #tpu.memory_space<vmem>>, vector<1x128xf32>
    %26 = vector.broadcast %25 : vector<1x128xf32> to vector<16x128xf32>
    %27 = arith.mulf %24, %26 : vector<16x128xf32>
    %c0_14 = arith.constant 0 : index
    %c0_15 = arith.constant 0 : index
    %28 = vector.load %arg6[%c0_14, %c0_15] : memref<1x128xf32, #tpu.memory_space<vmem>>, vector<1x128xf32>
    %29 = vector.broadcast %28 : vector<1x128xf32> to vector<16x128xf32>
    %30 = arith.addf %27, %29 : vector<16x128xf32>
    %31 = arith.truncf %30 : vector<16x128xf32> to vector<16x128xbf16>
    %c0_16 = arith.constant 0 : index
    %c0_17 = arith.constant 0 : index
    %32 = vector.load %arg7[%c0_16, %c0_17] : memref<16x128xbf16, #tpu.memory_space<vmem>>, vector<16x128xbf16>
    tpu.vector_store %arg7[%c0_16, %c0_17], %31 {strides = array<i32>} : memref<16x128xbf16, #tpu.memory_space<vmem>>, vector<16x128xbf16>,
    return
  }
  func.func @transform_0(%arg0: i32) -> (i32, i32) {
    %c0_i32 = arith.constant 0 : i32
    %c0_i32_0 = arith.constant 0 : i32
    return %arg0, %c0_i32 : i32, i32
  }
  func.func @transform_1(%arg0: i32) -> (i32, i32) {
    %c0_i32 = arith.constant 0 : i32
    %c0_i32_0 = arith.constant 0 : i32
    %c0_i32_1 = arith.constant 0 : i32
    return %c0_i32, %c0_i32_0 : i32, i32
  }
  func.func @transform_2(%arg0: i32) -> (i32, i32) {
    %c0_i32 = arith.constant 0 : i32
    %c0_i32_0 = arith.constant 0 : i32
    %c0_i32_1 = arith.constant 0 : i32
    return %c0_i32, %c0_i32_0 : i32, i32
  }
  func.func @transform_3(%arg0: i32) -> (i32, i32) {
    %c0_i32 = arith.constant 0 : i32
    %c0_i32_0 = arith.constant 0 : i32
    return %arg0, %c0_i32 : i32, i32
  }
  func.func @transform_4(%arg0: i32) -> (i32, i32) {
    %c0_i32 = arith.constant 0 : i32
    %c0_i32_0 = arith.constant 0 : i32
    %c0_i32_1 = arith.constant 0 : i32
    return %c0_i32, %c0_i32_0 : i32, i32
  }
  func.func @transform_5(%arg0: i32) -> (i32, i32) {
    %c0_i32 = arith.constant 0 : i32
    %c0_i32_0 = arith.constant 0 : i32
    %c0_i32_1 = arith.constant 0 : i32
    return %c0_i32, %c0_i32_0 : i32, i32
  }
  func.func @transform_6(%arg0: i32) -> (i32, i32) {
    %c0_i32 = arith.constant 0 : i32
    %c0_i32_0 = arith.constant 0 : i32
    return %arg0, %c0_i32 : i32, i32
  }
}

</mosaic_0001>

<llo_original>
// kernel: bert_forward.11
$region0: #{bert_forward.11}
  #allocation0 [shape = 'u32[]', space=smem, size = 0x4, offset = 0x4, fixed_abs, tag = 'smem constant byte address 0x4 - core index']
  #allocation1 [shape = 'u32[144,128]{1,0:T(1,128)}', space=vmem, size = 0x12000, scoped, tag = 'internal scratch']
  %s0 = inlined_call_operand.vmem [shape: f32[16,128], index: 0, kind: input, shape index: {}]
  %s1 = inlined_call_operand.vmem [shape: f32[1,128], index: 1, kind: input, shape index: {}]
  %s2 = inlined_call_operand.vmem [shape: f32[1,128], index: 2, kind: input, shape index: {}]
  %s3 = inlined_call_operand.vmem [shape: bf16[16,128], index: 3, kind: output, shape index: {}]
  %s4 = sld [smem:[#allocation0]]
  $region22: #{bert_forward.11} parent=0
    _
  %s6 = ssub.s32 1, %s4
  %s7 = scalar_select 0, %s6, %s4
  // Predicated region
  $region2: #{bert_forward.11} parent=0 // pred_check
    _
  $region3: #{bert_forward.11} parent=0 // pred_check_branch
    %9 = sbr.rel (0) target = $region5
  $region4: #{bert_forward.11} parent=0 // pred_region
    _
  $region5: #{bert_forward.11} parent=0 // pred_fallthru
    _
  // Predicated region
  $region6: #{bert_forward.11} parent=0 // pred_check
    _
  $region7: #{bert_forward.11} parent=0 // pred_check_branch
    %11 = sbr.rel (0) target = $region9
  $region8: #{bert_forward.11} parent=0 // pred_region
    _
  $region9: #{bert_forward.11} parent=0 // pred_fallthru
    _
  // Predicated region
  $region10: #{bert_forward.11} parent=0 // pred_check
    _
  $region11: #{bert_forward.11} parent=0 // pred_check_branch
    %13 = sbr.rel (0) target = $region13
  $region12: #{bert_forward.11} parent=0 // pred_region
    _
  $region13: #{bert_forward.11} parent=0 // pred_fallthru
    _
  %v14 = vld [vmem:[%s0] sm:$0xff]
  %v15 = vld [vmem:[%s0 + $0x8] sm:$0xff]
  %16 = vadd.xlane.f32.xlu0 %v14
  %v17 = vpop.xlane.xlu0 %16
  %18 = vadd.xlane.f32.xlu0 %v15
  %v19 = vpop.xlane.xlu0 %18
  %v20 = vrcp.pop 128.0
  %v21 = vmul.f32 %v17, %v20
  %v22 = vmul.f32 %v19, %v20
  %v23 = vsub.f32 %v14, %v21
  %v24 = vsub.f32 %v15, %v22
  %v25 = vmul.f32 %v23, %v23
  %v26 = vmul.f32 %v24, %v24
  %27 = vadd.xlane.f32.xlu0 %v25
  %v28 = vpop.xlane.xlu0 %27
  %29 = vadd.xlane.f32.xlu0 %v26
  %v30 = vpop.xlane.xlu0 %29
  %v31 = vmul.f32 %v28, %v20
  %v32 = vmul.f32 %v30, %v20
  %v33 = vadd.f32 %v31, 1e-12
  %v34 = vadd.f32 %v32, 1e-12
  %v35 = vrsqrt.pop %v33
  %v36 = vrsqrt.pop %v34
  %v37 = vmul.f32 %v23, %v35
  %v38 = vmul.f32 %v24, %v36
  %v39 = vld [vmem:[%s1] sm:$0x1]
  %v41 = vlaneseq
  %v42 = vshrl.u32 %v41, 7
  %v43 = vsub.s32 0, %v42
  %v44 = vrot.slane %v39, %v43
  %v46 = vmul.f32 %v37, %v44
  %v47 = vmul.f32 %v38, %v44
  %v48 = vld [vmem:[%s2] sm:$0x1]
  %v50 = vlaneseq
  %v51 = vshrl.u32 %v50, 7
  %v52 = vsub.s32 0, %v51
  %v53 = vrot.slane %v48, %v52
  %v55 = vadd.f32 %v46, %v53
  %v56 = vadd.f32 %v47, %v53
  %v57 = vpack.c.bf16 %v56, %v55
  %v59 = vunpack.c.l.b16 %v57
  %v60 = vunpack.c.h.b16 %v57
  %v61 = vpack.c.b16 %v59, %v59
  %v62 = vpack.c.b16 %v60, %v60
  %65 = vst [vmem:[%s3] sm:$0xf] %v61
  %66 = vst [vmem:[%s3 + $0x4] sm:$0xf] %v62
  // Predicated region
  $region14: #{bert_forward.11} parent=0 // pred_check
    _
  $region15: #{bert_forward.11} parent=0 // pred_check_branch
    %68 = sbr.rel (0) target = $region17
  $region16: #{bert_forward.11} parent=0 // pred_region
    _
  $region17: #{bert_forward.11} parent=0 // pred_fallthru
    _
  // Predicated region
  $region18: #{bert_forward.11} parent=0 // pred_check
    _
  $region19: #{bert_forward.11} parent=0 // pred_check_branch
    %70 = sbr.rel (0) target = $region21
  $region20: #{bert_forward.11} parent=0 // pred_region
    _
  $region21: #{bert_forward.11} parent=0 // pred_fallthru
    _

// kernel: bert_forward.14
$region0: #{bert_forward.14}
  #allocation0 [shape = 'u32[]', space=smem, size = 0x4, offset = 0x4, fixed_abs, tag = 'smem constant byte address 0x4 - core index']
  #allocation1 [shape = 'u32[144,128]{1,0:T(1,128)}', space=vmem, size = 0x12000, scoped, tag = 'internal scratch']
  %s0 = inlined_call_operand.vmem [shape: bf16[16,128], index: 0, kind: input, shape index: {}]
  %s1 = inlined_call_operand.vmem [shape: bf16[128,128], index: 1, kind: input, shape index: {}]
  %s2 = inlined_call_operand.vmem [shape: f32[1,128], index: 2, kind: input, shape index: {}]
  %s3 = inlined_call_operand.vmem [shape: bf16[16,128], index: 3, kind: input, shape index: {}]
  %s4 = inlined_call_operand.vmem [shape: f32[1,128], index: 4, kind: input, shape index: {}]
  %s5 = inlined_call_operand.vmem [shape: f32[1,128], index: 5, kind: input, shape index: {}]
  %s6 = inlined_call_operand.vmem [shape: bf16[16,128], index: 6, kind: output, shape index: {}]
  %s7 = sld [smem:[#allocation0]]
  $region34: #{bert_forward.14} parent=0
    _
  %s9 = ssub.s32 1, %s7
  %s10 = scalar_select 0, %s9, %s7
  // Predicated region
  $region2: #{bert_forward.14} parent=0 // pred_check
    _
  $region3: #{bert_forward.14} parent=0 // pred_check_branch
    %12 = sbr.rel (0) target = $region5
  $region4: #{bert_forward.14} parent=0 // pred_region
    _
  $region5: #{bert_forward.14} parent=0 // pred_fallthru
    _
  // Predicated region
  $region6: #{bert_forward.14} parent=0 // pred_check
    _
  $region7: #{bert_forward.14} parent=0 // pred_check_branch
    %14 = sbr.rel (0) target = $region9
  $region8: #{bert_forward.14} parent=0 // pred_region
    _
  $region9: #{bert_forward.14} parent=0 // pred_fallthru
    _
  // Predicated region
  $region10: #{bert_forward.14} parent=0 // pred_check
    _
  $region11: #{bert_forward.14} parent=0 // pred_check_branch
    %16 = sbr.rel (0) target = $region13
  $region12: #{bert_forward.14} parent=0 // pred_region
    _
  $region13: #{bert_forward.14} parent=0 // pred_fallthru
    _
  // Predicated region
  $region14: #{bert_forward.14} parent=0 // pred_check
    _
  $region15: #{bert_forward.14} parent=0 // pred_check_branch
    %18 = sbr.rel (0) target = $region17
  $region16: #{bert_forward.14} parent=0 // pred_region
    _
  $region17: #{bert_forward.14} parent=0 // pred_fallthru
    _
  // Predicated region
  $region18: #{bert_forward.14} parent=0 // pred_check
    _
  $region19: #{bert_forward.14} parent=0 // pred_check_branch
    %20 = sbr.rel (0) target = $region21
  $region20: #{bert_forward.14} parent=0 // pred_region
    _
  $region21: #{bert_forward.14} parent=0 // pred_fallthru
    _
  // Predicated region
  $region22: #{bert_forward.14} parent=0 // pred_check
    _
  $region23: #{bert_forward.14} parent=0 // pred_check_branch
    %22 = sbr.rel (0) target = $region25
  $region24: #{bert_forward.14} parent=0 // pred_region
    _
  $region25: #{bert_forward.14} parent=0 // pred_fallthru
    _
  %v24 = vld [vmem:[%s0] sm:$0xf]
  %v25 = vld [vmem:[%s0 + $0x4] sm:$0xf]
  %v26 = vld [vmem:[%s1] sm:$0xf]
  %v27 = vld [vmem:[%s1 + $0x4] sm:$0xf]
  %v28 = vld [vmem:[%s1 + $0x8] sm:$0xf]
  %v29 = vld [vmem:[%s1 + $0xc] sm:$0xf]
  %v30 = vld [vmem:[%s1 + $0x10] sm:$0xf]
  %v31 = vld [vmem:[%s1 + $0x14] sm:$0xf]
  %v32 = vld [vmem:[%s1 + $0x18] sm:$0xf]
  %v33 = vld [vmem:[%s1 + $0x1c] sm:$0xf]
  %v34 = vld [vmem:[%s1 + $0x20] sm:$0xf]
  %v35 = vld [vmem:[%s1 + $0x24] sm:$0xf]
  %v36 = vld [vmem:[%s1 + $0x28] sm:$0xf]
  %v37 = vld [vmem:[%s1 + $0x2c] sm:$0xf]
  %v38 = vld [vmem:[%s1 + $0x30] sm:$0xf]
  %v39 = vld [vmem:[%s1 + $0x34] sm:$0xf]
  %v40 = vld [vmem:[%s1 + $0x38] sm:$0xf]
  %v41 = vld [vmem:[%s1 + $0x3c] sm:$0xf]
  %v42 = vld [vmem:[%s2] sm:$0x1]
  %v44 = vlaneseq
  %v45 = vshrl.u32 %v44, 7
  %v46 = vsub.s32 0, %v45
  %v47 = vrot.slane %v42, %v46
  %v51 = vunpack.c.l.b16 %v24
  %v52 = vunpack.c.l.b16 %v25
  %v53 = vpack.c.b16 %v52, %v51
  %v71 = vunpack.c.l.b16 %v26
  %v72 = vunpack.c.l.b16 %v27
  %v73 = vunpack.c.l.b16 %v28
  %v74 = vunpack.c.l.b16 %v29
  %v75 = vunpack.c.l.b16 %v30
  %v76 = vunpack.c.l.b16 %v31
  %v77 = vunpack.c.l.b16 %v32
  %v78 = vunpack.c.l.b16 %v33
  %v79 = vunpack.c.l.b16 %v34
  %v80 = vunpack.c.l.b16 %v35
  %v81 = vunpack.c.l.b16 %v36
  %v82 = vunpack.c.l.b16 %v37
  %v83 = vunpack.c.l.b16 %v38
  %v84 = vunpack.c.l.b16 %v39
  %v85 = vunpack.c.l.b16 %v40
  %v86 = vunpack.c.l.b16 %v41
  %v87 = vpack.c.b16 %v72, %v71
  %v88 = vpack.c.b16 %v74, %v73
  %v89 = vpack.c.b16 %v76, %v75
  %v90 = vpack.c.b16 %v78, %v77
  %v91 = vpack.c.b16 %v80, %v79
  %v92 = vpack.c.b16 %v82, %v81
  %v93 = vpack.c.b16 %v84, %v83
  %v94 = vpack.c.b16 %v86, %v85
  %103 = vmatprep.subr.bf16.mxu0 0
  %104 = vmatpush1.bf16.msra.mxu0 %v94
  %105 = vmatprep.subr.bf16.mxu0 0
  %106 = vmatpush1.bf16.msra.mxu0 %v93
  %107 = vmatprep.subr.bf16.mxu0 0
  %108 = vmatpush1.bf16.msra.mxu0 %v92
  %109 = vmatprep.subr.bf16.mxu0 0
  %110 = vmatpush1.bf16.msra.mxu0 %v91
  %111 = vmatprep.subr.bf16.mxu0 0
  %112 = vmatpush1.bf16.msra.mxu0 %v90
  %113 = vmatprep.subr.bf16.mxu0 0
  %114 = vmatpush1.bf16.msra.mxu0 %v89
  %115 = vmatprep.subr.bf16.mxu0 0
  %116 = vmatpush1.bf16.msra.mxu0 %v88
  %117 = vmatprep.subr.bf16.mxu0 0
  %118 = vmatpush1.bf16.msra.mxu0 %v87
  %119 = vmatprep.subr.bf16.mxu0 0
  %120 = vmatpush2.bf16.msra.mxu0 0
  %121 = vmatprep.subr.bf16.mxu0 0
  %122 = vmatpush2.bf16.msra.mxu0 0
  %123 = vmatprep.subr.bf16.mxu0 0
  %124 = vmatpush2.bf16.msra.mxu0 0
  %125 = vmatprep.subr.bf16.mxu0 0
  %126 = vmatpush2.bf16.msra.mxu0 0
  %127 = vmatprep.subr.bf16.mxu0 0
  %128 = vmatpush2.bf16.msra.mxu0 0
  %129 = vmatprep.subr.bf16.mxu0 0
  %130 = vmatpush2.bf16.msra.mxu0 0
  %131 = vmatprep.subr.bf16.mxu0 0
  %132 = vmatpush2.bf16.msra.mxu0 0
  %133 = vmatprep.subr.bf16.mxu0 0
  %134 = vmatpush2.bf16.msra.mxu0 0
  %135 = vmatprep.mubr.bf16.mxu0 0
  %136 = vmatmul.mubr.bf16.gmra.mxu0 %v53
  %v137 = vpop.f32.mrf.mxu0
  %v138 = vadd.f32 %v47, %v137
  %v139 = vpop.f32.mrf.mxu0
  %v140 = vpop.f32.mrf.mxu0
  %v141 = vadd.f32 %v47, %v140
  %v142 = vpop.f32.mrf.mxu0
  %143 = vdwg.mxu0
  %v144 = vld [vmem:[%s3] sm:$0xf]
  %v145 = vld [vmem:[%s3 + $0x4] sm:$0xf]
  %v146 = vunpack.c.l.bf16 %v144
  %v147 = vunpack.c.l.bf16 %v145
  %v148 = vadd.f32 %v138, %v146
  %v149 = vadd.f32 %v141, %v147
  %150 = vadd.xlane.f32.xlu0 %v148
  %v151 = vpop.xlane.xlu0 %150
  %152 = vadd.xlane.f32.xlu0 %v149
  %v153 = vpop.xlane.xlu0 %152
  %v154 = vrcp.pop 128.0
  %v155 = vmul.f32 %v151, %v154
  %v156 = vmul.f32 %v153, %v154
  %v157 = vsub.f32 %v148, %v155
  %v158 = vsub.f32 %v149, %v156
  %v159 = vmul.f32 %v157, %v157
  %v160 = vmul.f32 %v158, %v158
  %161 = vadd.xlane.f32.xlu0 %v159
  %v162 = vpop.xlane.xlu0 %161
  %163 = vadd.xlane.f32.xlu0 %v160
  %v164 = vpop.xlane.xlu0 %163
  %v165 = vmul.f32 %v162, %v154
  %v166 = vmul.f32 %v164, %v154
  %v167 = vadd.f32 %v165, 1e-12
  %v168 = vadd.f32 %v166, 1e-12
  %v169 = vrsqrt.pop %v167
  %v170 = vrsqrt.pop %v168
  %v171 = vmul.f32 %v157, %v169
  %v172 = vmul.f32 %v158, %v170
  %v173 = vld [vmem:[%s4] sm:$0x1]
  %v175 = vlaneseq
  %v176 = vshrl.u32 %v175, 7
  %v177 = vsub.s32 0, %v176
  %v178 = vrot.slane %v173, %v177
  %v180 = vmul.f32 %v171, %v178
  %v181 = vmul.f32 %v172, %v178
  %v182 = vld [vmem:[%s5] sm:$0x1]
  %v184 = vlaneseq
  %v185 = vshrl.u32 %v184, 7
  %v186 = vsub.s32 0, %v185
  %v187 = vrot.slane %v182, %v186
  %v189 = vadd.f32 %v180, %v187
  %v190 = vadd.f32 %v181, %v187
  %v191 = vpack.c.bf16 %v190, %v189
  %v193 = vunpack.c.l.b16 %v191
  %v194 = vunpack.c.h.b16 %v191
  %v195 = vpack.c.b16 %v193, %v193
  %v196 = vpack.c.b16 %v194, %v194
  %199 = vst [vmem:[%s6] sm:$0xf] %v195
  %200 = vst [vmem:[%s6 + $0x4] sm:$0xf] %v196
  // Predicated region
  $region26: #{bert_forward.14} parent=0 // pred_check
    _
  $region27: #{bert_forward.14} parent=0 // pred_check_branch
    %202 = sbr.rel (0) target = $region29
  $region28: #{bert_forward.14} parent=0 // pred_region
    _
  $region29: #{bert_forward.14} parent=0 // pred_fallthru
    _
  // Predicated region
  $region30: #{bert_forward.14} parent=0 // pred_check
    _
  $region31: #{bert_forward.14} parent=0 // pred_check_branch
    %204 = sbr.rel (0) target = $region33
  $region32: #{bert_forward.14} parent=0 // pred_region
    _
  $region33: #{bert_forward.14} parent=0 // pred_fallthru
    _

// kernel: bert_forward.13
$region0: #{bert_forward.13}
  #allocation0 [shape = 'u32[]', space=smem, size = 0x4, offset = 0x4, fixed_abs, tag = 'smem constant byte address 0x4 - core index']
  #allocation1 [shape = 'u32[144,128]{1,0:T(1,128)}', space=vmem, size = 0x12000, scoped, tag = 'internal scratch']
  %s0 = inlined_call_operand.vmem [shape: bf16[2,8,384], index: 0, kind: input, shape index: {}, may-alias: {0,1,2}]
  %s1 = inlined_call_operand.vmem [shape: bf16[2,8,384], index: 1, kind: input, shape index: {}, may-alias: {0,1,2}]
  %s2 = inlined_call_operand.vmem [shape: bf16[2,8,384], index: 2, kind: input, shape index: {}, may-alias: {0,1,2}]
  %s3 = inlined_call_operand.vmem [shape: f32[2,1,8], index: 3, kind: input, shape index: {}]
  %s4 = inlined_call_operand.vmem [shape: bf16[2,8,128], index: 4, kind: output, shape index: {}]
  %s5 = sld [smem:[#allocation0]]
  $region49: #{bert_forward.13} parent=0
    _
  %s7 = ssub.s32 1, %s5
  %s8 = scalar_select 0, %s7, %s5
  loop: start=0, step=1, limit=4
  $region2: #{bert_forward.13} parent=0 // loop_pre_header
    _
  $region3: #{bert_forward.13} parent=0 // loop_header
    %s10 = sphi 0, %s14
    %p11 = scmp.ge.s32.totalorder %s10, 4
    %s17 = sphi 0, %s36
    %s18 = sphi 0, %s32
    %s19 = sphi 0, %s28
    %s20 = sphi 0, %s17
    %s21 = sphi 0, %s18
    %s22 = sphi 0, %s19
    %s23 = sphi 0, %s20
    %s24 = sphi 0, %s21
    %s25 = sphi 0, %s22
    %s43 = sphi 0, %s45
    %s46 = sphi 0, %s43
    %s47 = sphi 0, %s46
    %s63 = sphi 0, %s47
    %s73 = sphi 0, %s75
    %s76 = sphi 0, %s73
    %s77 = sphi 0, %s76
    %s93 = sphi 0, %s77
    %s103 = sphi 0, %s105
    %s106 = sphi 0, %s103
    %s107 = sphi 0, %s106
    %s123 = sphi 0, %s107
    %s129 = sphi 0, %s131
    %s132 = sphi 0, %s129
    %s133 = sphi 0, %s132
    %s149 = sphi 0, %s133
    %s159 = sphi 0, %s161
    %s162 = sphi 0, %s159
    %s163 = sphi 0, %s162
    %s179 = sphi 0, %s163
  $region4: #{bert_forward.13} parent=0 // loop_header_branch
    %13 = sbr.rel (%p11) target = $region8
  $region5: #{bert_forward.13} parent=0 // loop_body
    %s15 = ssub.s32 %s10, 1
    %s16 = ssub.s32 %s10, 2
    %s26 = sadd.s32 1, %s19
    %p27 = scmp.ge.s32.totalorder %s26, 1
    %s28 = scalar_select %p27, 0, %s26
    %s29 = sadd.s32 1, %s18
    %s30 = scalar_select %p27, %s29, %s18
    %p31 = scmp.ge.s32.totalorder %s30, 1
    %s32 = scalar_select %p31, 0, %s30
    %s33 = sadd.s32 1, %s17
    %s34 = scalar_select %p31, %s33, %s17
    %p35 = scmp.ge.s32.totalorder %s34, 2
    %s36 = scalar_select %p35, 0, %s34
    %s37 = ssub.s32 %s17, %s36
    %s38 = ssub.s32 %s19, %s28
    %s39 = sor.u32 %s37, %s38
    %s40 = ssub.s32 %s18, %s32
    %s41 = sor.u32 %s39, %s40
    %p42 = scmp.eq.s32.totalorder %s41, 0
    %s44 = sadd.s32 %s43, 1
    %s45 = scalar_select %p42, %s43, %s44
    %p48 = pneg %p42
    %p49 = scmp.eq.s32.totalorder %s10, 1
    %p50 = por %p48, %p49
    %p51 = scmp.ne.s32.totalorder %s43, %s46
    %p52 = scmp.eq.s32.totalorder %s10, 0
    %p53 = por %p51, %p52
    %p54 = scmp.ne.s32.totalorder %s43, %s46
    %p55 = scmp.eq.s32.totalorder %s15, 1
    %p56 = por %p54, %p55
    %p57 = scmp.ne.s32.totalorder %s46, %s47
    %p58 = scmp.eq.s32.totalorder %s15, 0
    %p59 = por %p57, %p58
    %p60 = scmp.ne.s32.totalorder %s46, %s47
    %p61 = scmp.eq.s32.totalorder %s16, 1
    %p62 = por %p60, %p61
    %p64 = scmp.ne.s32.totalorder %s47, %s63
    %p65 = scmp.eq.s32.totalorder %s16, 0
    %p66 = por %p64, %p65
    %s67 = sadd.s32 %s18, 1
    %s68 = sadd.s32 %s32, 1
    %s69 = ssub.s32 %s17, %s36
    %s70 = ssub.s32 %s67, %s68
    %s71 = sor.u32 %s69, %s70
    %p72 = scmp.eq.s32.totalorder %s71, 0
    %s74 = sadd.s32 %s73, 1
    %s75 = scalar_select %p72, %s73, %s74
    %p78 = pneg %p72
    %p79 = scmp.eq.s32.totalorder %s10, 1
    %p80 = por %p78, %p79
    %p81 = scmp.ne.s32.totalorder %s73, %s76
    %p82 = scmp.eq.s32.totalorder %s10, 0
    %p83 = por %p81, %p82
    %p84 = scmp.ne.s32.totalorder %s73, %s76
    %p85 = scmp.eq.s32.totalorder %s15, 1
    %p86 = por %p84, %p85
    %p87 = scmp.ne.s32.totalorder %s76, %s77
    %p88 = scmp.eq.s32.totalorder %s15, 0
    %p89 = por %p87, %p88
    %p90 = scmp.ne.s32.totalorder %s76, %s77
    %p91 = scmp.eq.s32.totalorder %s16, 1
    %p92 = por %p90, %p91
    %p94 = scmp.ne.s32.totalorder %s77, %s93
    %p95 = scmp.eq.s32.totalorder %s16, 0
    %p96 = por %p94, %p95
    %s97 = sadd.s32 %s18, 2
    %s98 = sadd.s32 %s32, 2
    %s99 = ssub.s32 %s17, %s36
    %s100 = ssub.s32 %s97, %s98
    %s101 = sor.u32 %s99, %s100
    %p102 = scmp.eq.s32.totalorder %s101, 0
    %s104 = sadd.s32 %s103, 1
    %s105 = scalar_select %p102, %s103, %s104
    %p108 = pneg %p102
    %p109 = scmp.eq.s32.totalorder %s10, 1
    %p110 = por %p108, %p109
    %p111 = scmp.ne.s32.totalorder %s103, %s106
    %p112 = scmp.eq.s32.totalorder %s10, 0
    %p113 = por %p111, %p112
    %p114 = scmp.ne.s32.totalorder %s103, %s106
    %p115 = scmp.eq.s32.totalorder %s15, 1
    %p116 = por %p114, %p115
    %p117 = scmp.ne.s32.totalorder %s106, %s107
    %p118 = scmp.eq.s32.totalorder %s15, 0
    %p119 = por %p117, %p118
    %p120 = scmp.ne.s32.totalorder %s106, %s107
    %p121 = scmp.eq.s32.totalorder %s16, 1
    %p122 = por %p120, %p121
    %p124 = scmp.ne.s32.totalorder %s107, %s123
    %p125 = scmp.eq.s32.totalorder %s16, 0
    %p126 = por %p124, %p125
    %s127 = ssub.s32 %s17, %s36
    %p128 = scmp.eq.s32.totalorder %s127, 0
    %s130 = sadd.s32 %s129, 1
    %s131 = scalar_select %p128, %s129, %s130
    %p134 = pneg %p128
    %p135 = scmp.eq.s32.totalorder %s10, 1
    %p136 = por %p134, %p135
    %p137 = scmp.ne.s32.totalorder %s129, %s132
    %p138 = scmp.eq.s32.totalorder %s10, 0
    %p139 = por %p137, %p138
    %p140 = scmp.ne.s32.totalorder %s129, %s132
    %p141 = scmp.eq.s32.totalorder %s15, 1
    %p142 = por %p140, %p141
    %p143 = scmp.ne.s32.totalorder %s132, %s133
    %p144 = scmp.eq.s32.totalorder %s15, 0
    %p145 = por %p143, %p144
    %p146 = scmp.ne.s32.totalorder %s132, %s133
    %p147 = scmp.eq.s32.totalorder %s16, 1
    %p148 = por %p146, %p147
    %p150 = scmp.ne.s32.totalorder %s133, %s149
    %p151 = scmp.eq.s32.totalorder %s16, 0
    %p152 = por %p150, %p151
    %s153 = ssub.s32 %s17, %s36
    %s154 = ssub.s32 %s19, %s28
    %s155 = sor.u32 %s153, %s154
    %s156 = ssub.s32 %s18, %s32
    %s157 = sor.u32 %s155, %s156
    %p158 = scmp.eq.s32.totalorder %s157, 0
    %s160 = sadd.s32 %s159, 1
    %s161 = scalar_select %p158, %s159, %s160
    %p164 = pneg %p158
    %p165 = scmp.eq.s32.totalorder %s10, 1
    %p166 = por %p164, %p165
    %p167 = scmp.ne.s32.totalorder %s159, %s162
    %p168 = scmp.eq.s32.totalorder %s10, 0
    %p169 = por %p167, %p168
    %p170 = scmp.ne.s32.totalorder %s159, %s162
    %p171 = scmp.eq.s32.totalorder %s15, 1
    %p172 = por %p170, %p171
    %p173 = scmp.ne.s32.totalorder %s162, %s163
    %p174 = scmp.eq.s32.totalorder %s15, 0
    %p175 = por %p173, %p174
    %p176 = scmp.ne.s32.totalorder %s162, %s163
    %p177 = scmp.eq.s32.totalorder %s16, 1
    %p178 = por %p176, %p177
    %p180 = scmp.ne.s32.totalorder %s163, %s179
    %p181 = scmp.eq.s32.totalorder %s16, 0
    %p182 = por %p180, %p181
    %p183 = scmp.le.s32.totalorder 1, %s10
    %p184 = scmp.lt.s32.totalorder %s10, 3
    %p185 = pnand %p183, %p184
    %p186 = pneg %p185
    // Predicated region
    $region9: #{bert_forward.13} parent=5 // pred_check
      _
    $region10: #{bert_forward.13} parent=5 // pred_check_branch
      %188 = sbr.rel (%p185) target = $region12
    $region11: #{bert_forward.13} parent=5 // pred_region
      %s189 = ssub.s32 %s10, 1
    $region12: #{bert_forward.13} parent=5 // pred_fallthru
      _
    %p190 = scmp.lt.s32.totalorder %s10, 2
    // Predicated region
    $region13: #{bert_forward.13} parent=5 // pred_check
      %p191 = pneg %p190
    $region14: #{bert_forward.13} parent=5 // pred_check_branch
      %193 = sbr.rel (%p191) target = $region16
    $region15: #{bert_forward.13} parent=5 // pred_region
      // Predicated region
      $region17: #{bert_forward.13} parent=15 // pred_check
        %p194 = pneg %p53
      $region18: #{bert_forward.13} parent=15 // pred_check_branch
        %196 = sbr.rel (%p194) target = $region20
      $region19: #{bert_forward.13} parent=15 // pred_region
        %p197 = scmp.lt.s32.totalorder %s17, 1
        %s198 = scalar_select %p197, %s17, 1
        %p199 = scmp.lt.s32.totalorder %s19, 0
        %s200 = scalar_select %p199, %s19, 0
        %p201 = scmp.lt.s32.totalorder %s18, 2
        %s202 = scalar_select %p201, %s18, 2
        %s203 = smul.addr %s200, 3
        %s204 = sadd.s32 %s202, %s203
        %s205 = smul.addr %s198, 3
        %s206 = sadd.s32 %s204, %s205
        %s207 = smul.addr %s206, 4
        %s208 = scalar_lea.vmem %s0, %s207
      $region20: #{bert_forward.13} parent=15 // pred_fallthru
        _
      // Predicated region
      $region21: #{bert_forward.13} parent=15 // pred_check
        %p209 = pneg %p83
      $region22: #{bert_forward.13} parent=15 // pred_check_branch
        %211 = sbr.rel (%p209) target = $region24
      $region23: #{bert_forward.13} parent=15 // pred_region
        %s212 = sadd.s32 %s18, 1
        %p213 = scmp.lt.s32.totalorder %s17, 1
        %s214 = scalar_select %p213, %s17, 1
        %p215 = scmp.lt.s32.totalorder %s212, 2
        %s216 = scalar_select %p215, %s212, 2
        %s217 = smul.addr %s214, 3
        %s218 = sadd.s32 %s216, %s217
        %s219 = smul.addr %s218, 4
        %s220 = scalar_lea.vmem %s1, %s219
        %s221 = sadd.s32 %s18, 1
      $region24: #{bert_forward.13} parent=15 // pred_fallthru
        _
      // Predicated region
      $region25: #{bert_forward.13} parent=15 // pred_check
        %p222 = pneg %p113
      $region26: #{bert_forward.13} parent=15 // pred_check_branch
        %224 = sbr.rel (%p222) target = $region28
      $region27: #{bert_forward.13} parent=15 // pred_region
        %s225 = sadd.s32 %s18, 2
        %p226 = scmp.lt.s32.totalorder %s17, 1
        %s227 = scalar_select %p226, %s17, 1
        %p228 = scmp.lt.s32.totalorder %s225, 2
        %s229 = scalar_select %p228, %s225, 2
        %s230 = smul.addr %s227, 3
        %s231 = sadd.s32 %s229, %s230
        %s232 = smul.addr %s231, 4
        %s233 = scalar_lea.vmem %s2, %s232
        %s234 = sadd.s32 %s18, 2
      $region28: #{bert_forward.13} parent=15 // pred_fallthru
        _
      // Predicated region
      $region29: #{bert_forward.13} parent=15 // pred_check
        %p235 = pneg %p139
      $region30: #{bert_forward.13} parent=15 // pred_check_branch
        %237 = sbr.rel (%p235) target = $region32
      $region31: #{bert_forward.13} parent=15 // pred_region
        %p238 = scmp.lt.s32.totalorder %s17, 1
        %s239 = scalar_select %p238, %s17, 1
        %s240 = scalar_lea.vmem %s3, %s239
      $region32: #{bert_forward.13} parent=15 // pred_fallthru
        _
    $region16: #{bert_forward.13} parent=5 // pred_fallthru
      _
    %p241 = scmp.le.s32.totalorder 1, %s10
    %p242 = scmp.lt.s32.totalorder %s10, 3
    %p243 = pnand %p241, %p242
    %p244 = pneg %p243
    // Predicated region
    $region33: #{bert_forward.13} parent=5 // pred_check
      _
    $region34: #{bert_forward.13} parent=5 // pred_check_branch
      %246 = sbr.rel (%p243) target = $region36
    $region35: #{bert_forward.13} parent=5 // pred_region
      %s247 = ssub.s32 %s10, 1
      %p248 = scmp.lt.s32.totalorder %s20, 1
      %s249 = scalar_select %p248, %s20, 1
      %p250 = scmp.lt.s32.totalorder %s22, 0
      %s251 = scalar_select %p250, %s22, 0
      %p252 = scmp.lt.s32.totalorder %s21, 2
      %s253 = scalar_select %p252, %s21, 2
      %s254 = smul.addr %s251, 3
      %s255 = sadd.s32 %s253, %s254
      %s256 = smul.addr %s249, 3
      %s257 = sadd.s32 %s255, %s256
      %s258 = smul.addr %s257, 4
      %s259 = scalar_lea.vmem %s0, %s258
      %p260 = pneg %p59
      %p261 = pneg %p56
      %s262 = sadd.s32 %s21, 1
      %p263 = scmp.lt.s32.totalorder %s20, 1
      %s264 = scalar_select %p263, %s20, 1
      %p265 = scmp.lt.s32.totalorder %s262, 2
      %s266 = scalar_select %p265, %s262, 2
      %s267 = smul.addr %s264, 3
      %s268 = sadd.s32 %s266, %s267
      %s269 = smul.addr %s268, 4
      %s270 = scalar_lea.vmem %s1, %s269
      %p271 = pneg %p89
      %p272 = pneg %p86
      %s273 = sadd.s32 %s21, 2
      %p274 = scmp.lt.s32.totalorder %s20, 1
      %s275 = scalar_select %p274, %s20, 1
      %p276 = scmp.lt.s32.totalorder %s273, 2
      %s277 = scalar_select %p276, %s273, 2
      %s278 = smul.addr %s275, 3
      %s279 = sadd.s32 %s277, %s278
      %s280 = smul.addr %s279, 4
      %s281 = scalar_lea.vmem %s2, %s280
      %p282 = pneg %p119
      %p283 = pneg %p116
      %p284 = scmp.lt.s32.totalorder %s20, 1
      %s285 = scalar_select %p284, %s20, 1
      %s286 = scalar_lea.vmem %s3, %s285
      %p287 = pneg %p145
      %p288 = pneg %p142
      %p289 = pneg %p175
      %p290 = pneg %p172
      %p291 = scmp.lt.s32.totalorder %s20, 1
      %s292 = scalar_select %p291, %s20, 1
      %p293 = scmp.lt.s32.totalorder %s22, 0
      %s294 = scalar_select %p293, %s22, 0
      %p295 = scmp.lt.s32.totalorder %s21, 0
      %s296 = scalar_select %p295, %s21, 0
      %s297 = sadd.s32 %s296, %s294
      %s298 = sadd.s32 %s297, %s292
      %s299 = smul.addr %s298, 4
      %s300 = scalar_lea.vmem %s4, %s299
      %p301 = scmp.lt.s32.totalorder %s20, 1
      %s302 = scalar_select %p301, %s20, 1
      %p303 = scmp.lt.s32.totalorder %s22, 0
      %s304 = scalar_select %p303, %s22, 0
      %p305 = scmp.lt.s32.totalorder %s21, 2
      %s306 = scalar_select %p305, %s21, 2
      %s307 = smul.addr %s304, 3
      %s308 = sadd.s32 %s306, %s307
      %s309 = smul.addr %s302, 3
      %s310 = sadd.s32 %s308, %s309
      %s311 = smul.addr %s310, 4
      %s312 = scalar_lea.vmem %s0, %s311
      %s313 = sadd.s32 %s21, 1
      %p314 = scmp.lt.s32.totalorder %s20, 1
      %s315 = scalar_select %p314, %s20, 1
      %p316 = scmp.lt.s32.totalorder %s313, 2
      %s317 = scalar_select %p316, %s313, 2
      %s318 = smul.addr %s315, 3
      %s319 = sadd.s32 %s317, %s318
      %s320 = smul.addr %s319, 4
      %s321 = scalar_lea.vmem %s1, %s320
      %s322 = sadd.s32 %s21, 1
      %s323 = sadd.s32 %s21, 2
      %p324 = scmp.lt.s32.totalorder %s20, 1
      %s325 = scalar_select %p324, %s20, 1
      %p326 = scmp.lt.s32.totalorder %s323, 2
      %s327 = scalar_select %p326, %s323, 2
      %s328 = smul.addr %s325, 3
      %s329 = sadd.s32 %s327, %s328
      %s330 = smul.addr %s329, 4
      %s331 = scalar_lea.vmem %s2, %s330
      %s332 = sadd.s32 %s21, 2
      %p333 = scmp.lt.s32.totalorder %s20, 1
      %s334 = scalar_select %p333, %s20, 1
      %s335 = scalar_lea.vmem %s3, %s334
      %p336 = scmp.lt.s32.totalorder %s20, 1
      %s337 = scalar_select %p336, %s20, 1
      %p338 = scmp.lt.s32.totalorder %s22, 0
      %s339 = scalar_select %p338, %s22, 0
      %p340 = scmp.lt.s32.totalorder %s21, 0
      %s341 = scalar_select %p340, %s21, 0
      %s342 = sadd.s32 %s341, %s339
      %s343 = sadd.s32 %s342, %s337
      %s344 = smul.addr %s343, 4
      %s345 = scalar_lea.vmem %s4, %s344
      %v347 = vld [vmem:[%s335] sm:$0x1]
      %v348 = vld [vmem:[%s312] sm:$0xf]
      %v349 = vld [vmem:[%s321] sm:$0xf]
      %v350 = vld [vmem:[%s331] sm:$0xf]
      %v352 = vlaneseq
      %v353 = vshrl.u32 %v352, 7
      %v354 = vsub.s32 0, %v353
      %v355 = vrot.slane %v347, %v354
      %vm357 = vcmask 523264
      %v359 = vsel %vm357, %v348, 0
      %v362 = vsel %vm357, %v349, 0
      %364 = vmatprep.subr.bf16.mxu0 0
      %365 = vmatpush1.bf16.xpose.msra.mxu0 0
      %366 = vmatprep.subr.bf16.mxu0 0
      %367 = vmatpush1.bf16.xpose.msra.mxu0 0
      %368 = vmatprep.subr.bf16.mxu0 0
      %369 = vmatpush1.bf16.xpose.msra.mxu0 0
      %370 = vmatprep.subr.bf16.mxu0 0
      %371 = vmatpush1.bf16.xpose.msra.mxu0 0
      %372 = vmatprep.subr.bf16.mxu0 0
      %373 = vmatpush1.bf16.xpose.msra.mxu0 0
      %374 = vmatprep.subr.bf16.mxu0 0
      %375 = vmatpush1.bf16.xpose.msra.mxu0 0
      %376 = vmatprep.subr.bf16.mxu0 0
      %377 = vmatpush1.bf16.xpose.msra.mxu0 0
      %378 = vmatprep.subr.bf16.mxu0 0
      %379 = vmatpush1.bf16.xpose.msra.mxu0 %v362
      %380 = vmatprep.subr.bf16.mxu0 0
      %381 = vmatpush2.bf16.xpose.msra.mxu0 0
      %382 = vmatprep.subr.bf16.mxu0 0
      %383 = vmatpush2.bf16.xpose.msra.mxu0 0
      %384 = vmatprep.subr.bf16.mxu0 0
      %385 = vmatpush2.bf16.xpose.msra.mxu0 0
      %386 = vmatprep.subr.bf16.mxu0 0
      %387 = vmatpush2.bf16.xpose.msra.mxu0 0
      %388 = vmatprep.subr.bf16.mxu0 0
      %389 = vmatpush2.bf16.xpose.msra.mxu0 0
      %390 = vmatprep.subr.bf16.mxu0 0
      %391 = vmatpush2.bf16.xpose.msra.mxu0 0
      %392 = vmatprep.subr.bf16.mxu0 0
      %393 = vmatpush2.bf16.xpose.msra.mxu0 0
      %394 = vmatprep.subr.bf16.mxu0 0
      %395 = vmatpush2.bf16.xpose.msra.mxu0 0
      %396 = vmatprep.mubr.bf16.mxu0 0
      %397 = vmatmul.mubr.bf16.gmra.mxu0 %v359
      %v398 = vpop.f32.mrf.mxu0
      %v399 = vadd.f32 %v355, %v398
      %v400 = vpop.f32.mrf.mxu0
      %v401 = vpop.f32.mrf.mxu0
      %v402 = vpop.f32.mrf.mxu0
      %403 = vdwg.mxu0
      %vm404 = vcmask 64512
      %v405 = vsel %vm404, %v399, -inf
      %406 = vmax.xlane.f32.xlu0 %v405
      %v407 = vpop.xlane.xlu0 %406
      %v408 = vsub.f32 %v399, %v407
      %v409 = vmul.f32 %v408, 1.442695
      %v410 = vpow.pop %v409
      %v411 = vsel %vm404, %v410, 0.0
      %412 = vadd.xlane.f32.xlu0 %v411
      %v413 = vpop.xlane.xlu0 %412
      %v414 = vrcp.pop %v413
      %v415 = vmul.f32 %v410, %v414
      %v416 = vpack.c.bf16 %v415, %v415
      %v418 = vsel %vm404, %v416, 0
      %vm420 = vcmask 1043456
      %v422 = vsel %vm420, %v350, 0
      %424 = vmatprep.subr.bf16.mxu0 0
      %425 = vmatpush1.bf16.msra.mxu0 0
      %426 = vmatprep.subr.bf16.mxu0 0
      %427 = vmatpush1.bf16.msra.mxu0 0
      %428 = vmatprep.subr.bf16.mxu0 0
      %429 = vmatpush1.bf16.msra.mxu0 0
      %430 = vmatprep.subr.bf16.mxu0 0
      %431 = vmatpush1.bf16.msra.mxu0 0
      %432 = vmatprep.subr.bf16.mxu0 0
      %433 = vmatpush1.bf16.msra.mxu0 0
      %434 = vmatprep.subr.bf16.mxu0 0
      %435 = vmatpush1.bf16.msra.mxu0 0
      %436 = vmatprep.subr.bf16.mxu0 0
      %437 = vmatpush1.bf16.msra.mxu0 0
      %438 = vmatprep.subr.bf16.mxu0 0
      %439 = vmatpush1.bf16.msra.mxu0 %v422
      %440 = vmatprep.subr.bf16.mxu0 0
      %441 = vmatpush2.bf16.msra.mxu0 0
      %442 = vmatprep.subr.bf16.mxu0 0
      %443 = vmatpush2.bf16.msra.mxu0 0
      %444 = vmatprep.subr.bf16.mxu0 0
      %445 = vmatpush2.bf16.msra.mxu0 0
      %446 = vmatprep.subr.bf16.mxu0 0
      %447 = vmatpush2.bf16.msra.mxu0 0
      %448 = vmatprep.subr.bf16.mxu0 0
      %449 = vmatpush2.bf16.msra.mxu0 0
      %450 = vmatprep.subr.bf16.mxu0 0
      %451 = vmatpush2.bf16.msra.mxu0 0
      %452 = vmatprep.subr.bf16.mxu0 0
      %453 = vmatpush2.bf16.msra.mxu0 0
      %454 = vmatprep.subr.bf16.mxu0 0
      %455 = vmatpush2.bf16.msra.mxu0 0
      %456 = vmatprep.mubr.bf16.mxu0 0
      %457 = vmatmul.mubr.bf16.gmra.mxu0 %v418
      %v458 = vpop.f32.mrf.mxu0
      %v459 = vadd.f32 0.0, %v458
      %v460 = vpop.f32.mrf.mxu0
      %v461 = vpop.f32.mrf.mxu0
      %v462 = vpop.f32.mrf.mxu0
      %463 = vdwg.mxu0
      %v464 = vpack.c.bf16 %v459, %v459
      %v465 = vld [vmem:[%s312] sm:$0xf]
      %v466 = vld [vmem:[%s321] sm:$0xf]
      %v467 = vld [vmem:[%s331] sm:$0xf]
      %v469 = vunpack.c.l.b16 %v465
      %v470 = vpack.c.b16 %v469, %v469
      %471 = vrot.lane.b32.xlu0 %v470, 64
      %v472 = vpop.permute.xlu0 %471
      %v474 = vunpack.c.l.b16 %v466
      %v475 = vpack.c.b16 %v474, %v474
      %476 = vrot.lane.b32.xlu0 %v475, 64
      %v477 = vpop.permute.xlu0 %476
      %v479 = vsel %vm357, %v472, 0
      %v482 = vsel %vm357, %v477, 0
      %484 = vmatprep.subr.bf16.mxu0 0
      %485 = vmatpush1.bf16.xpose.msra.mxu0 0
      %486 = vmatprep.subr.bf16.mxu0 0
      %487 = vmatpush1.bf16.xpose.msra.mxu0 0
      %488 = vmatprep.subr.bf16.mxu0 0
      %489 = vmatpush1.bf16.xpose.msra.mxu0 0
      %490 = vmatprep.subr.bf16.mxu0 0
      %491 = vmatpush1.bf16.xpose.msra.mxu0 0
      %492 = vmatprep.subr.bf16.mxu0 0
      %493 = vmatpush1.bf16.xpose.msra.mxu0 0
      %494 = vmatprep.subr.bf16.mxu0 0
      %495 = vmatpush1.bf16.xpose.msra.mxu0 0
      %496 = vmatprep.subr.bf16.mxu0 0
      %497 = vmatpush1.bf16.xpose.msra.mxu0 0
      %498 = vmatprep.subr.bf16.mxu0 0
      %499 = vmatpush1.bf16.xpose.msra.mxu0 %v482
      %500 = vmatprep.subr.bf16.mxu0 0
      %501 = vmatpush2.bf16.xpose.msra.mxu0 0
      %502 = vmatprep.subr.bf16.mxu0 0
      %503 = vmatpush2.bf16.xpose.msra.mxu0 0
      %504 = vmatprep.subr.bf16.mxu0 0
      %505 = vmatpush2.bf16.xpose.msra.mxu0 0
      %506 = vmatprep.subr.bf16.mxu0 0
      %507 = vmatpush2.bf16.xpose.msra.mxu0 0
      %508 = vmatprep.subr.bf16.mxu0 0
      %509 = vmatpush2.bf16.xpose.msra.mxu0 0
      %510 = vmatprep.subr.bf16.mxu0 0
      %511 = vmatpush2.bf16.xpose.msra.mxu0 0
      %512 = vmatprep.subr.bf16.mxu0 0
      %513 = vmatpush2.bf16.xpose.msra.mxu0 0
      %514 = vmatprep.subr.bf16.mxu0 0
      %515 = vmatpush2.bf16.xpose.msra.mxu0 0
      %516 = vmatprep.mubr.bf16.mxu0 0
      %517 = vmatmul.mubr.bf16.gmra.mxu0 %v479
      %v518 = vpop.f32.mrf.mxu0
      %v519 = vadd.f32 %v355, %v518
      %v520 = vpop.f32.mrf.mxu0
      %v521 = vpop.f32.mrf.mxu0
      %v522 = vpop.f32.mrf.mxu0
      %523 = vdwg.mxu0
      %v524 = vsel %vm404, %v519, -inf
      %525 = vmax.xlane.f32.xlu0 %v524
      %v526 = vpop.xlane.xlu0 %525
      %v527 = vsub.f32 %v519, %v526
      %v528 = vmul.f32 %v527, 1.442695
      %v529 = vpow.pop %v528
      %v530 = vsel %vm404, %v529, 0.0
      %531 = vadd.xlane.f32.xlu0 %v530
      %v532 = vpop.xlane.xlu0 %531
      %v533 = vrcp.pop %v532
      %v534 = vmul.f32 %v529, %v533
      %v535 = vpack.c.bf16 %v534, %v534
      %v537 = vunpack.c.l.b16 %v467
      %v538 = vpack.c.b16 %v537, %v537
      %539 = vrot.lane.b32.xlu0 %v538, 64
      %v540 = vpop.permute.xlu0 %539
      %v542 = vsel %vm404, %v535, 0
      %v545 = vsel %vm420, %v540, 0
      %547 = vmatprep.subr.bf16.mxu0 0
      %548 = vmatpush1.bf16.msra.mxu0 0
      %549 = vmatprep.subr.bf16.mxu0 0
      %550 = vmatpush1.bf16.msra.mxu0 0
      %551 = vmatprep.subr.bf16.mxu0 0
      %552 = vmatpush1.bf16.msra.mxu0 0
      %553 = vmatprep.subr.bf16.mxu0 0
      %554 = vmatpush1.bf16.msra.mxu0 0
      %555 = vmatprep.subr.bf16.mxu0 0
      %556 = vmatpush1.bf16.msra.mxu0 0
      %557 = vmatprep.subr.bf16.mxu0 0
      %558 = vmatpush1.bf16.msra.mxu0 0
      %559 = vmatprep.subr.bf16.mxu0 0
      %560 = vmatpush1.bf16.msra.mxu0 0
      %561 = vmatprep.subr.bf16.mxu0 0
      %562 = vmatpush1.bf16.msra.mxu0 %v545
      %563 = vmatprep.subr.bf16.mxu0 0
      %564 = vmatpush2.bf16.msra.mxu0 0
      %565 = vmatprep.subr.bf16.mxu0 0
      %566 = vmatpush2.bf16.msra.mxu0 0
      %567 = vmatprep.subr.bf16.mxu0 0
      %568 = vmatpush2.bf16.msra.mxu0 0
      %569 = vmatprep.subr.bf16.mxu0 0
      %570 = vmatpush2.bf16.msra.mxu0 0
      %571 = vmatprep.subr.bf16.mxu0 0
      %572 = vmatpush2.bf16.msra.mxu0 0
      %573 = vmatprep.subr.bf16.mxu0 0
      %574 = vmatpush2.bf16.msra.mxu0 0
      %575 = vmatprep.subr.bf16.mxu0 0
      %576 = vmatpush2.bf16.msra.mxu0 0
      %577 = vmatprep.subr.bf16.mxu0 0
      %578 = vmatpush2.bf16.msra.mxu0 0
      %579 = vmatprep.mubr.bf16.mxu0 0
      %580 = vmatmul.mubr.bf16.gmra.mxu0 %v542
      %v581 = vpop.f32.mrf.mxu0
      %v582 = vadd.f32 0.0, %v581
      %v583 = vpop.f32.mrf.mxu0
      %v584 = vpop.f32.mrf.mxu0
      %v585 = vpop.f32.mrf.mxu0
      %586 = vdwg.mxu0
      %v587 = vpack.c.bf16 %v582, %v582
      %589 = vrot.lane.b32.xlu0 %v587, 64
      %v590 = vpop.permute.xlu0 %589
      %v593 = vsel %vm357, %v464, %v590
      %595 = vst [vmem:[%s345] sm:$0xf] %v593
      %p596 = scmp.lt.s32.totalorder %s20, 1
      %s597 = scalar_select %p596, %s20, 1
      %p598 = scmp.lt.s32.totalorder %s22, 0
      %s599 = scalar_select %p598, %s22, 0
      %p600 = scmp.lt.s32.totalorder %s21, 0
      %s601 = scalar_select %p600, %s21, 0
      %s602 = sadd.s32 %s601, %s599
      %s603 = sadd.s32 %s602, %s597
      %s604 = smul.addr %s603, 4
      %s605 = scalar_lea.vmem %s4, %s604
      // Predicated region
      $region37: #{bert_forward.13} parent=35 // pred_check
        %p606 = pneg %p172
      $region38: #{bert_forward.13} parent=35 // pred_check_branch
        %608 = sbr.rel (%p606) target = $region40
      $region39: #{bert_forward.13} parent=35 // pred_region
        _
      $region40: #{bert_forward.13} parent=35 // pred_fallthru
        _
    $region36: #{bert_forward.13} parent=5 // pred_fallthru
      _
    %p609 = scmp.le.s32.totalorder 2, %s10
    // Predicated region
    $region41: #{bert_forward.13} parent=5 // pred_check
      %p610 = pneg %p609
    $region42: #{bert_forward.13} parent=5 // pred_check_branch
      %612 = sbr.rel (%p610) target = $region44
    $region43: #{bert_forward.13} parent=5 // pred_region
      %s613 = ssub.s32 %s10, 2
      // Predicated region
      $region45: #{bert_forward.13} parent=43 // pred_check
        %p614 = pneg %p178
      $region46: #{bert_forward.13} parent=43 // pred_check_branch
        %616 = sbr.rel (%p614) target = $region48
      $region47: #{bert_forward.13} parent=43 // pred_region
        %p617 = scmp.lt.s32.totalorder %s23, 1
        %s618 = scalar_select %p617, %s23, 1
        %p619 = scmp.lt.s32.totalorder %s25, 0
        %s620 = scalar_select %p619, %s25, 0
        %p621 = scmp.lt.s32.totalorder %s24, 0
        %s622 = scalar_select %p621, %s24, 0
        %s623 = sadd.s32 %s622, %s620
        %s624 = sadd.s32 %s623, %s618
        %s625 = smul.addr %s624, 4
        %s626 = scalar_lea.vmem %s4, %s625
      $region48: #{bert_forward.13} parent=43 // pred_fallthru
        _
    $region44: #{bert_forward.13} parent=5 // pred_fallthru
      _
  $region6: #{bert_forward.13} parent=0 // loop_footer
    %s14 = sadd.s32 1, %s10
  $region7: #{bert_forward.13} parent=0 // loop_footer_branch
    %9 = sbr.rel target = $region3
  $region8: #{bert_forward.13} parent=0 // loop_exit
    _

// kernel: bert_forward.12
$region0: #{bert_forward.12}
  #allocation0 [shape = 'u32[]', space=smem, size = 0x4, offset = 0x4, fixed_abs, tag = 'smem constant byte address 0x4 - core index']
  #allocation1 [shape = 'u32[144,128]{1,0:T(1,128)}', space=vmem, size = 0x12000, scoped, tag = 'internal scratch']
  %s0 = inlined_call_operand.vmem [shape: bf16[16,128], index: 0, kind: input, shape index: {}]
  %s1 = inlined_call_operand.vmem [shape: bf16[128,384], index: 1, kind: input, shape index: {}]
  %s2 = inlined_call_operand.vmem [shape: f32[1,384], index: 2, kind: input, shape index: {}]
  %s3 = inlined_call_operand.vmem [shape: bf16[16,384], index: 3, kind: output, shape index: {}]
  %s4 = sld [smem:[#allocation0]]
  $region22: #{bert_forward.12} parent=0
    _
  %s6 = ssub.s32 1, %s4
  %s7 = scalar_select 0, %s6, %s4
  // Predicated region
  $region2: #{bert_forward.12} parent=0 // pred_check
    _
  $region3: #{bert_forward.12} parent=0 // pred_check_branch
    %9 = sbr.rel (0) target = $region5
  $region4: #{bert_forward.12} parent=0 // pred_region
    _
  $region5: #{bert_forward.12} parent=0 // pred_fallthru
    _
  // Predicated region
  $region6: #{bert_forward.12} parent=0 // pred_check
    _
  $region7: #{bert_forward.12} parent=0 // pred_check_branch
    %11 = sbr.rel (0) target = $region9
  $region8: #{bert_forward.12} parent=0 // pred_region
    _
  $region9: #{bert_forward.12} parent=0 // pred_fallthru
    _
  // Predicated region
  $region10: #{bert_forward.12} parent=0 // pred_check
    _
  $region11: #{bert_forward.12} parent=0 // pred_check_branch
    %13 = sbr.rel (0) target = $region13
  $region12: #{bert_forward.12} parent=0 // pred_region
    _
  $region13: #{bert_forward.12} parent=0 // pred_fallthru
    _
  %v15 = vld [vmem:[%s0] sm:$0xf]
  %v16 = vld [vmem:[%s0 + $0x4] sm:$0xf]
  %v17 = vld [vmem:[%s1] sm:$0xff]
  %v18 = vld [vmem:[%s1 + $0x8] sm:$0xf]
  %v19 = vld [vmem:[%s1 + $0xc] sm:$0xff]
  %v20 = vld [vmem:[%s1 + $0x14] sm:$0xf]
  %v21 = vld [vmem:[%s1 + $0x18] sm:$0xff]
  %v22 = vld [vmem:[%s1 + $0x20] sm:$0xf]
  %v23 = vld [vmem:[%s1 + $0x24] sm:$0xff]
  %v24 = vld [vmem:[%s1 + $0x2c] sm:$0xf]
  %v25 = vld [vmem:[%s1 + $0x30] sm:$0xff]
  %v26 = vld [vmem:[%s1 + $0x38] sm:$0xf]
  %v27 = vld [vmem:[%s1 + $0x3c] sm:$0xff]
  %v28 = vld [vmem:[%s1 + $0x44] sm:$0xf]
  %v29 = vld [vmem:[%s1 + $0x48] sm:$0xff]
  %v30 = vld [vmem:[%s1 + $0x50] sm:$0xf]
  %v31 = vld [vmem:[%s1 + $0x54] sm:$0xff]
  %v32 = vld [vmem:[%s1 + $0x5c] sm:$0xf]
  %v33 = vld [vmem:[%s1 + $0x60] sm:$0xff]
  %v34 = vld [vmem:[%s1 + $0x68] sm:$0xf]
  %v35 = vld [vmem:[%s1 + $0x6c] sm:$0xff]
  %v36 = vld [vmem:[%s1 + $0x74] sm:$0xf]
  %v37 = vld [vmem:[%s1 + $0x78] sm:$0xff]
  %v38 = vld [vmem:[%s1 + $0x80] sm:$0xf]
  %v39 = vld [vmem:[%s1 + $0x84] sm:$0xff]
  %v40 = vld [vmem:[%s1 + $0x8c] sm:$0xf]
  %v41 = vld [vmem:[%s1 + $0x90] sm:$0xff]
  %v42 = vld [vmem:[%s1 + $0x98] sm:$0xf]
  %v43 = vld [vmem:[%s1 + $0x9c] sm:$0xff]
  %v44 = vld [vmem:[%s1 + $0xa4] sm:$0xf]
  %v45 = vld [vmem:[%s1 + $0xa8] sm:$0xff]
  %v46 = vld [vmem:[%s1 + $0xb0] sm:$0xf]
  %v47 = vld [vmem:[%s1 + $0xb4] sm:$0xff]
  %v48 = vld [vmem:[%s1 + $0xbc] sm:$0xf]
  %v49 = vld [vmem:[%s2] sm:$0x7]
  %v51 = vlaneseq
  %v52 = vshrl.u32 %v51, 7
  %v53 = vsub.s32 0, %v52
  %v54 = vrot.slane %v49, %v53
  %v55 = vlaneseq
  %v56 = vshrl.u32 %v55, 7
  %v57 = vsub.s32 1, %v56
  %v58 = vrot.slane %v49, %v57
  %v59 = vlaneseq
  %v60 = vshrl.u32 %v59, 7
  %v61 = vsub.s32 2, %v60
  %v62 = vrot.slane %v49, %v61
  %v68 = vunpack.c.l.b16 %v15
  %v69 = vunpack.c.l.b16 %v16
  %v70 = vpack.c.b16 %v69, %v68
  %v104 = vunpack.c.l.b16 %v17
  %v105 = vunpack.c.h.b16 %v17
  %v106 = vunpack.c.l.b16 %v18
  %v107 = vunpack.c.l.b16 %v19
  %v108 = vunpack.c.h.b16 %v19
  %v109 = vunpack.c.l.b16 %v20
  %v110 = vunpack.c.l.b16 %v21
  %v111 = vunpack.c.h.b16 %v21
  %v112 = vunpack.c.l.b16 %v22
  %v113 = vunpack.c.l.b16 %v23
  %v114 = vunpack.c.h.b16 %v23
  %v115 = vunpack.c.l.b16 %v24
  %v116 = vunpack.c.l.b16 %v25
  %v117 = vunpack.c.h.b16 %v25
  %v118 = vunpack.c.l.b16 %v26
  %v119 = vunpack.c.l.b16 %v27
  %v120 = vunpack.c.h.b16 %v27
  %v121 = vunpack.c.l.b16 %v28
  %v122 = vunpack.c.l.b16 %v29
  %v123 = vunpack.c.h.b16 %v29
  %v124 = vunpack.c.l.b16 %v30
  %v125 = vunpack.c.l.b16 %v31
  %v126 = vunpack.c.h.b16 %v31
  %v127 = vunpack.c.l.b16 %v32
  %v128 = vunpack.c.l.b16 %v33
  %v129 = vunpack.c.h.b16 %v33
  %v130 = vunpack.c.l.b16 %v34
  %v131 = vunpack.c.l.b16 %v35
  %v132 = vunpack.c.h.b16 %v35
  %v133 = vunpack.c.l.b16 %v36
  %v134 = vunpack.c.l.b16 %v37
  %v135 = vunpack.c.h.b16 %v37
  %v136 = vunpack.c.l.b16 %v38
  %v137 = vunpack.c.l.b16 %v39
  %v138 = vunpack.c.h.b16 %v39
  %v139 = vunpack.c.l.b16 %v40
  %v140 = vunpack.c.l.b16 %v41
  %v141 = vunpack.c.h.b16 %v41
  %v142 = vunpack.c.l.b16 %v42
  %v143 = vunpack.c.l.b16 %v43
  %v144 = vunpack.c.h.b16 %v43
  %v145 = vunpack.c.l.b16 %v44
  %v146 = vunpack.c.l.b16 %v45
  %v147 = vunpack.c.h.b16 %v45
  %v148 = vunpack.c.l.b16 %v46
  %v149 = vunpack.c.l.b16 %v47
  %v150 = vunpack.c.h.b16 %v47
  %v151 = vunpack.c.l.b16 %v48
  %v152 = vpack.c.b16 %v107, %v104
  %v153 = vpack.c.b16 %v108, %v105
  %v154 = vpack.c.b16 %v109, %v106
  %v155 = vpack.c.b16 %v113, %v110
  %v156 = vpack.c.b16 %v114, %v111
  %v157 = vpack.c.b16 %v115, %v112
  %v158 = vpack.c.b16 %v119, %v116
  %v159 = vpack.c.b16 %v120, %v117
  %v160 = vpack.c.b16 %v121, %v118
  %v161 = vpack.c.b16 %v125, %v122
  %v162 = vpack.c.b16 %v126, %v123
  %v163 = vpack.c.b16 %v127, %v124
  %v164 = vpack.c.b16 %v131, %v128
  %v165 = vpack.c.b16 %v132, %v129
  %v166 = vpack.c.b16 %v133, %v130
  %v167 = vpack.c.b16 %v137, %v134
  %v168 = vpack.c.b16 %v138, %v135
  %v169 = vpack.c.b16 %v139, %v136
  %v170 = vpack.c.b16 %v143, %v140
  %v171 = vpack.c.b16 %v144, %v141
  %v172 = vpack.c.b16 %v145, %v142
  %v173 = vpack.c.b16 %v149, %v146
  %v174 = vpack.c.b16 %v150, %v147
  %v175 = vpack.c.b16 %v151, %v148
  %200 = vmatprep.subr.bf16.mxu0 %v174
  %201 = vmatpush1.bf16.msra.mxu0 %v173
  %202 = vmatprep.subr.bf16.mxu0 %v171
  %203 = vmatpush1.bf16.msra.mxu0 %v170
  %204 = vmatprep.subr.bf16.mxu0 %v168
  %205 = vmatpush1.bf16.msra.mxu0 %v167
  %206 = vmatprep.subr.bf16.mxu0 %v165
  %207 = vmatpush1.bf16.msra.mxu0 %v164
  %208 = vmatprep.subr.bf16.mxu0 %v162
  %209 = vmatpush1.bf16.msra.mxu0 %v161
  %210 = vmatprep.subr.bf16.mxu0 %v159
  %211 = vmatpush1.bf16.msra.mxu0 %v158
  %212 = vmatprep.subr.bf16.mxu0 %v156
  %213 = vmatpush1.bf16.msra.mxu0 %v155
  %214 = vmatprep.subr.bf16.mxu0 %v153
  %215 = vmatpush1.bf16.msra.mxu0 %v152
  %216 = vmatprep.subr.bf16.mxu0 0
  %217 = vmatpush2.bf16.msra.mxu0 0
  %218 = vmatprep.subr.bf16.mxu0 0
  %219 = vmatpush2.bf16.msra.mxu0 0
  %220 = vmatprep.subr.bf16.mxu0 0
  %221 = vmatpush2.bf16.msra.mxu0 0
  %222 = vmatprep.subr.bf16.mxu0 0
  %223 = vmatpush2.bf16.msra.mxu0 0
  %224 = vmatprep.subr.bf16.mxu0 0
  %225 = vmatpush2.bf16.msra.mxu0 0
  %226 = vmatprep.subr.bf16.mxu0 0
  %227 = vmatpush2.bf16.msra.mxu0 0
  %228 = vmatprep.subr.bf16.mxu0 0
  %229 = vmatpush2.bf16.msra.mxu0 0
  %230 = vmatprep.subr.bf16.mxu0 0
  %231 = vmatpush2.bf16.msra.mxu0 0
  %232 = vmatprep.mubr.bf16.mxu0 0
  %233 = vmatmul.mubr.bf16.gmra.mxu0 %v70
  %v234 = vpop.f32.mrf.mxu0
  %v235 = vadd.f32 %v54, %v234
  %v236 = vpop.f32.mrf.mxu0
  %v237 = vadd.f32 %v58, %v236
  %v238 = vpop.f32.mrf.mxu0
  %v239 = vadd.f32 %v54, %v238
  %v240 = vpop.f32.mrf.mxu0
  %v241 = vadd.f32 %v58, %v240
  %242 = vdwg.mxu0
  %243 = vmatprep.subr.bf16.mxu0 0
  %244 = vmatpush1.bf16.msra.mxu0 %v175
  %245 = vmatprep.subr.bf16.mxu0 0
  %246 = vmatpush1.bf16.msra.mxu0 %v172
  %247 = vmatprep.subr.bf16.mxu0 0
  %248 = vmatpush1.bf16.msra.mxu0 %v169
  %249 = vmatprep.subr.bf16.mxu0 0
  %250 = vmatpush1.bf16.msra.mxu0 %v166
  %251 = vmatprep.subr.bf16.mxu0 0
  %252 = vmatpush1.bf16.msra.mxu0 %v163
  %253 = vmatprep.subr.bf16.mxu0 0
  %254 = vmatpush1.bf16.msra.mxu0 %v160
  %255 = vmatprep.subr.bf16.mxu0 0
  %256 = vmatpush1.bf16.msra.mxu0 %v157
  %257 = vmatprep.subr.bf16.mxu0 0
  %258 = vmatpush1.bf16.msra.mxu0 %v154
  %259 = vmatprep.subr.bf16.mxu0 0
  %260 = vmatpush2.bf16.msra.mxu0 0
  %261 = vmatprep.subr.bf16.mxu0 0
  %262 = vmatpush2.bf16.msra.mxu0 0
  %263 = vmatprep.subr.bf16.mxu0 0
  %264 = vmatpush2.bf16.msra.mxu0 0
  %265 = vmatprep.subr.bf16.mxu0 0
  %266 = vmatpush2.bf16.msra.mxu0 0
  %267 = vmatprep.subr.bf16.mxu0 0
  %268 = vmatpush2.bf16.msra.mxu0 0
  %269 = vmatprep.subr.bf16.mxu0 0
  %270 = vmatpush2.bf16.msra.mxu0 0
  %271 = vmatprep.subr.bf16.mxu0 0
  %272 = vmatpush2.bf16.msra.mxu0 0
  %273 = vmatprep.subr.bf16.mxu0 0
  %274 = vmatpush2.bf16.msra.mxu0 0
  %275 = vmatprep.mubr.bf16.mxu0 0
  %276 = vmatmul.mubr.bf16.gmra.mxu0 %v70
  %v277 = vpop.f32.mrf.mxu0
  %v278 = vadd.f32 %v62, %v277
  %v279 = vpop.f32.mrf.mxu0
  %v280 = vpop.f32.mrf.mxu0
  %v281 = vadd.f32 %v62, %v280
  %v282 = vpop.f32.mrf.mxu0
  %283 = vdwg.mxu0
  %v284 = vpack.c.bf16 %v239, %v235
  %v285 = vpack.c.bf16 %v241, %v237
  %v286 = vpack.c.bf16 %v281, %v278
  %v290 = vunpack.c.l.b16 %v284
  %v291 = vunpack.c.l.b16 %v285
  %v292 = vunpack.c.l.b16 %v286
  %v293 = vunpack.c.h.b16 %v284
  %v294 = vunpack.c.h.b16 %v285
  %v295 = vunpack.c.h.b16 %v286
  %v296 = vpack.c.b16 %v291, %v290
  %v297 = vpack.c.b16 %v292, %v292
  %v298 = vpack.c.b16 %v294, %v293
  %v299 = vpack.c.b16 %v295, %v295
  %304 = vst [vmem:[%s3] sm:$0xff] %v296
  %305 = vst [vmem:[%s3 + $0x8] sm:$0xf] %v297
  %306 = vst [vmem:[%s3 + $0xc] sm:$0xff] %v298
  %307 = vst [vmem:[%s3 + $0x14] sm:$0xf] %v299
  // Predicated region
  $region14: #{bert_forward.12} parent=0 // pred_check
    _
  $region15: #{bert_forward.12} parent=0 // pred_check_branch
    %309 = sbr.rel (0) target = $region17
  $region16: #{bert_forward.12} parent=0 // pred_region
    _
  $region17: #{bert_forward.12} parent=0 // pred_fallthru
    _
  // Predicated region
  $region18: #{bert_forward.12} parent=0 // pred_check
    _
  $region19: #{bert_forward.12} parent=0 // pred_check_branch
    %311 = sbr.rel (0) target = $region21
  $region20: #{bert_forward.12} parent=0 // pred_region
    _
  $region21: #{bert_forward.12} parent=0 // pred_fallthru
    _

// kernel: bert_forward.15
$region0: #{bert_forward.15}
  #allocation0 [shape = 'u32[]', space=smem, size = 0x4, offset = 0x4, fixed_abs, tag = 'smem constant byte address 0x4 - core index']
  #allocation1 [shape = 'u32[144,128]{1,0:T(1,128)}', space=vmem, size = 0x12000, scoped, tag = 'internal scratch']
  %s0 = inlined_call_operand.vmem [shape: bf16[16,128], index: 0, kind: input, shape index: {}]
  %s1 = inlined_call_operand.vmem [shape: bf16[128,256], index: 1, kind: input, shape index: {}]
  %s2 = inlined_call_operand.vmem [shape: f32[1,256], index: 2, kind: input, shape index: {}]
  %s3 = inlined_call_operand.vmem [shape: bf16[16,256], index: 3, kind: output, shape index: {}]
  %s4 = sld [smem:[#allocation0]]
  $region22: #{bert_forward.15} parent=0
    _
  %s6 = ssub.s32 1, %s4
  %s7 = scalar_select 0, %s6, %s4
  // Predicated region
  $region2: #{bert_forward.15} parent=0 // pred_check
    _
  $region3: #{bert_forward.15} parent=0 // pred_check_branch
    %9 = sbr.rel (0) target = $region5
  $region4: #{bert_forward.15} parent=0 // pred_region
    _
  $region5: #{bert_forward.15} parent=0 // pred_fallthru
    _
  // Predicated region
  $region6: #{bert_forward.15} parent=0 // pred_check
    _
  $region7: #{bert_forward.15} parent=0 // pred_check_branch
    %11 = sbr.rel (0) target = $region9
  $region8: #{bert_forward.15} parent=0 // pred_region
    _
  $region9: #{bert_forward.15} parent=0 // pred_fallthru
    _
  // Predicated region
  $region10: #{bert_forward.15} parent=0 // pred_check
    _
  $region11: #{bert_forward.15} parent=0 // pred_check_branch
    %13 = sbr.rel (0) target = $region13
  $region12: #{bert_forward.15} parent=0 // pred_region
    _
  $region13: #{bert_forward.15} parent=0 // pred_fallthru
    _
  %v15 = vld [vmem:[%s0] sm:$0xf]
  %v16 = vld [vmem:[%s0 + $0x4] sm:$0xf]
  %v17 = vld [vmem:[%s1] sm:$0xff]
  %v18 = vld [vmem:[%s1 + $0x8] sm:$0xff]
  %v19 = vld [vmem:[%s1 + $0x10] sm:$0xff]
  %v20 = vld [vmem:[%s1 + $0x18] sm:$0xff]
  %v21 = vld [vmem:[%s1 + $0x20] sm:$0xff]
  %v22 = vld [vmem:[%s1 + $0x28] sm:$0xff]
  %v23 = vld [vmem:[%s1 + $0x30] sm:$0xff]
  %v24 = vld [vmem:[%s1 + $0x38] sm:$0xff]
  %v25 = vld [vmem:[%s1 + $0x40] sm:$0xff]
  %v26 = vld [vmem:[%s1 + $0x48] sm:$0xff]
  %v27 = vld [vmem:[%s1 + $0x50] sm:$0xff]
  %v28 = vld [vmem:[%s1 + $0x58] sm:$0xff]
  %v29 = vld [vmem:[%s1 + $0x60] sm:$0xff]
  %v30 = vld [vmem:[%s1 + $0x68] sm:$0xff]
  %v31 = vld [vmem:[%s1 + $0x70] sm:$0xff]
  %v32 = vld [vmem:[%s1 + $0x78] sm:$0xff]
  %v33 = vld [vmem:[%s2] sm:$0x3]
  %v35 = vlaneseq
  %v36 = vshrl.u32 %v35, 7
  %v37 = vsub.s32 0, %v36
  %v38 = vrot.slane %v33, %v37
  %v39 = vlaneseq
  %v40 = vshrl.u32 %v39, 7
  %v41 = vsub.s32 1, %v40
  %v42 = vrot.slane %v33, %v41
  %v47 = vunpack.c.l.b16 %v15
  %v48 = vunpack.c.l.b16 %v16
  %v49 = vpack.c.b16 %v48, %v47
  %v67 = vunpack.c.l.b16 %v17
  %v68 = vunpack.c.h.b16 %v17
  %v69 = vunpack.c.l.b16 %v18
  %v70 = vunpack.c.h.b16 %v18
  %v71 = vunpack.c.l.b16 %v19
  %v72 = vunpack.c.h.b16 %v19
  %v73 = vunpack.c.l.b16 %v20
  %v74 = vunpack.c.h.b16 %v20
  %v75 = vunpack.c.l.b16 %v21
  %v76 = vunpack.c.h.b16 %v21
  %v77 = vunpack.c.l.b16 %v22
  %v78 = vunpack.c.h.b16 %v22
  %v79 = vunpack.c.l.b16 %v23
  %v80 = vunpack.c.h.b16 %v23
  %v81 = vunpack.c.l.b16 %v24
  %v82 = vunpack.c.h.b16 %v24
  %v83 = vunpack.c.l.b16 %v25
  %v84 = vunpack.c.h.b16 %v25
  %v85 = vunpack.c.l.b16 %v26
  %v86 = vunpack.c.h.b16 %v26
  %v87 = vunpack.c.l.b16 %v27
  %v88 = vunpack.c.h.b16 %v27
  %v89 = vunpack.c.l.b16 %v28
  %v90 = vunpack.c.h.b16 %v28
  %v91 = vunpack.c.l.b16 %v29
  %v92 = vunpack.c.h.b16 %v29
  %v93 = vunpack.c.l.b16 %v30
  %v94 = vunpack.c.h.b16 %v30
  %v95 = vunpack.c.l.b16 %v31
  %v96 = vunpack.c.h.b16 %v31
  %v97 = vunpack.c.l.b16 %v32
  %v98 = vunpack.c.h.b16 %v32
  %v99 = vpack.c.b16 %v69, %v67
  %v100 = vpack.c.b16 %v70, %v68
  %v101 = vpack.c.b16 %v73, %v71
  %v102 = vpack.c.b16 %v74, %v72
  %v103 = vpack.c.b16 %v77, %v75
  %v104 = vpack.c.b16 %v78, %v76
  %v105 = vpack.c.b16 %v81, %v79
  %v106 = vpack.c.b16 %v82, %v80
  %v107 = vpack.c.b16 %v85, %v83
  %v108 = vpack.c.b16 %v86, %v84
  %v109 = vpack.c.b16 %v89, %v87
  %v110 = vpack.c.b16 %v90, %v88
  %v111 = vpack.c.b16 %v93, %v91
  %v112 = vpack.c.b16 %v94, %v92
  %v113 = vpack.c.b16 %v97, %v95
  %v114 = vpack.c.b16 %v98, %v96
  %131 = vmatprep.subr.bf16.mxu0 %v114
  %132 = vmatpush1.bf16.msra.mxu0 %v113
  %133 = vmatprep.subr.bf16.mxu0 %v112
  %134 = vmatpush1.bf16.msra.mxu0 %v111
  %135 = vmatprep.subr.bf16.mxu0 %v110
  %136 = vmatpush1.bf16.msra.mxu0 %v109
  %137 = vmatprep.subr.bf16.mxu0 %v108
  %138 = vmatpush1.bf16.msra.mxu0 %v107
  %139 = vmatprep.subr.bf16.mxu0 %v106
  %140 = vmatpush1.bf16.msra.mxu0 %v105
  %141 = vmatprep.subr.bf16.mxu0 %v104
  %142 = vmatpush1.bf16.msra.mxu0 %v103
  %143 = vmatprep.subr.bf16.mxu0 %v102
  %144 = vmatpush1.bf16.msra.mxu0 %v101
  %145 = vmatprep.subr.bf16.mxu0 %v100
  %146 = vmatpush1.bf16.msra.mxu0 %v99
  %147 = vmatprep.subr.bf16.mxu0 0
  %148 = vmatpush2.bf16.msra.mxu0 0
  %149 = vmatprep.subr.bf16.mxu0 0
  %150 = vmatpush2.bf16.msra.mxu0 0
  %151 = vmatprep.subr.bf16.mxu0 0
  %152 = vmatpush2.bf16.msra.mxu0 0
  %153 = vmatprep.subr.bf16.mxu0 0
  %154 = vmatpush2.bf16.msra.mxu0 0
  %155 = vmatprep.subr.bf16.mxu0 0
  %156 = vmatpush2.bf16.msra.mxu0 0
  %157 = vmatprep.subr.bf16.mxu0 0
  %158 = vmatpush2.bf16.msra.mxu0 0
  %159 = vmatprep.subr.bf16.mxu0 0
  %160 = vmatpush2.bf16.msra.mxu0 0
  %161 = vmatprep.subr.bf16.mxu0 0
  %162 = vmatpush2.bf16.msra.mxu0 0
  %163 = vmatprep.mubr.bf16.mxu0 0
  %164 = vmatmul.mubr.bf16.gmra.mxu0 %v49
  %v165 = vpop.f32.mrf.mxu0
  %v166 = vadd.f32 %v38, %v165
  %v167 = vpop.f32.mrf.mxu0
  %v168 = vadd.f32 %v42, %v167
  %v169 = vpop.f32.mrf.mxu0
  %v170 = vadd.f32 %v38, %v169
  %v171 = vpop.f32.mrf.mxu0
  %v172 = vadd.f32 %v42, %v171
  %173 = vdwg.mxu0
  %v174 = vmul.f32 %v166, 0.5
  %v175 = vmul.f32 %v168, 0.5
  %v176 = vmul.f32 %v170, 0.5
  %v177 = vmul.f32 %v172, 0.5
  %v178 = vmul.f32 %v166, 0.044715
  %v179 = vmul.f32 %v168, 0.044715
  %v180 = vmul.f32 %v170, 0.044715
  %v181 = vmul.f32 %v172, 0.044715
  %v182 = vmul.f32 %v178, %v166
  %v183 = vmul.f32 %v179, %v168
  %v184 = vmul.f32 %v180, %v170
  %v185 = vmul.f32 %v181, %v172
  %v186 = vmul.f32 %v182, %v166
  %v187 = vmul.f32 %v183, %v168
  %v188 = vmul.f32 %v184, %v170
  %v189 = vmul.f32 %v185, %v172
  %v190 = vadd.f32 %v166, %v186
  %v191 = vadd.f32 %v168, %v187
  %v192 = vadd.f32 %v170, %v188
  %v193 = vadd.f32 %v172, %v189
  %v194 = vmul.f32 %v190, 0.7978846
  %v195 = vmul.f32 %v191, 0.7978846
  %v196 = vmul.f32 %v192, 0.7978846
  %v197 = vmul.f32 %v193, 0.7978846
  %v198 = vtanh.pop %v194
  %v199 = vtanh.pop %v195
  %v200 = vtanh.pop %v196
  %v201 = vtanh.pop %v197
  %v202 = vadd.f32 %v198, 1.0
  %v203 = vadd.f32 %v199, 1.0
  %v204 = vadd.f32 %v200, 1.0
  %v205 = vadd.f32 %v201, 1.0
  %v206 = vmul.f32 %v174, %v202
  %v207 = vmul.f32 %v175, %v203
  %v208 = vmul.f32 %v176, %v204
  %v209 = vmul.f32 %v177, %v205
  %v210 = vpack.c.bf16 %v208, %v206
  %v211 = vpack.c.bf16 %v209, %v207
  %v214 = vunpack.c.l.b16 %v210
  %v215 = vunpack.c.l.b16 %v211
  %v216 = vunpack.c.h.b16 %v210
  %v217 = vunpack.c.h.b16 %v211
  %v218 = vpack.c.b16 %v215, %v214
  %v219 = vpack.c.b16 %v217, %v216
  %222 = vst [vmem:[%s3] sm:$0xff] %v218
  %223 = vst [vmem:[%s3 + $0x8] sm:$0xff] %v219
  // Predicated region
  $region14: #{bert_forward.15} parent=0 // pred_check
    _
  $region15: #{bert_forward.15} parent=0 // pred_check_branch
    %225 = sbr.rel (0) target = $region17
  $region16: #{bert_forward.15} parent=0 // pred_region
    _
  $region17: #{bert_forward.15} parent=0 // pred_fallthru
    _
  // Predicated region
  $region18: #{bert_forward.15} parent=0 // pred_check
    _
  $region19: #{bert_forward.15} parent=0 // pred_check_branch
    %227 = sbr.rel (0) target = $region21
  $region20: #{bert_forward.15} parent=0 // pred_region
    _
  $region21: #{bert_forward.15} parent=0 // pred_fallthru
    _

// kernel: bert_forward.16
$region0: #{bert_forward.16}
  #allocation0 [shape = 'u32[]', space=smem, size = 0x4, offset = 0x4, fixed_abs, tag = 'smem constant byte address 0x4 - core index']
  #allocation1 [shape = 'u32[144,128]{1,0:T(1,128)}', space=vmem, size = 0x12000, scoped, tag = 'internal scratch']
  %s0 = inlined_call_operand.vmem [shape: bf16[16,256], index: 0, kind: input, shape index: {}]
  %s1 = inlined_call_operand.vmem [shape: bf16[256,128], index: 1, kind: input, shape index: {}]
  %s2 = inlined_call_operand.vmem [shape: f32[1,128], index: 2, kind: input, shape index: {}]
  %s3 = inlined_call_operand.vmem [shape: bf16[16,128], index: 3, kind: input, shape index: {}]
  %s4 = inlined_call_operand.vmem [shape: f32[1,128], index: 4, kind: input, shape index: {}]
  %s5 = inlined_call_operand.vmem [shape: f32[1,128], index: 5, kind: input, shape index: {}]
  %s6 = inlined_call_operand.vmem [shape: bf16[16,128], index: 6, kind: output, shape index: {}]
  %s7 = sld [smem:[#allocation0]]
  $region34: #{bert_forward.16} parent=0
    _
  %s9 = ssub.s32 1, %s7
  %s10 = scalar_select 0, %s9, %s7
  // Predicated region
  $region2: #{bert_forward.16} parent=0 // pred_check
    _
  $region3: #{bert_forward.16} parent=0 // pred_check_branch
    %12 = sbr.rel (0) target = $region5
  $region4: #{bert_forward.16} parent=0 // pred_region
    _
  $region5: #{bert_forward.16} parent=0 // pred_fallthru
    _
  // Predicated region
  $region6: #{bert_forward.16} parent=0 // pred_check
    _
  $region7: #{bert_forward.16} parent=0 // pred_check_branch
    %14 = sbr.rel (0) target = $region9
  $region8: #{bert_forward.16} parent=0 // pred_region
    _
  $region9: #{bert_forward.16} parent=0 // pred_fallthru
    _
  // Predicated region
  $region10: #{bert_forward.16} parent=0 // pred_check
    _
  $region11: #{bert_forward.16} parent=0 // pred_check_branch
    %16 = sbr.rel (0) target = $region13
  $region12: #{bert_forward.16} parent=0 // pred_region
    _
  $region13: #{bert_forward.16} parent=0 // pred_fallthru
    _
  // Predicated region
  $region14: #{bert_forward.16} parent=0 // pred_check
    _
  $region15: #{bert_forward.16} parent=0 // pred_check_branch
    %18 = sbr.rel (0) target = $region17
  $region16: #{bert_forward.16} parent=0 // pred_region
    _
  $region17: #{bert_forward.16} parent=0 // pred_fallthru
    _
  // Predicated region
  $region18: #{bert_forward.16} parent=0 // pred_check
    _
  $region19: #{bert_forward.16} parent=0 // pred_check_branch
    %20 = sbr.rel (0) target = $region21
  $region20: #{bert_forward.16} parent=0 // pred_region
    _
  $region21: #{bert_forward.16} parent=0 // pred_fallthru
    _
  // Predicated region
  $region22: #{bert_forward.16} parent=0 // pred_check
    _
  $region23: #{bert_forward.16} parent=0 // pred_check_branch
    %22 = sbr.rel (0) target = $region25
  $region24: #{bert_forward.16} parent=0 // pred_region
    _
  $region25: #{bert_forward.16} parent=0 // pred_fallthru
    _
  %v24 = vld [vmem:[%s0] sm:$0xff]
  %v25 = vld [vmem:[%s0 + $0x8] sm:$0xff]
  %v26 = vld [vmem:[%s1] sm:$0xf]
  %v27 = vld [vmem:[%s1 + $0x4] sm:$0xf]
  %v28 = vld [vmem:[%s1 + $0x8] sm:$0xf]
  %v29 = vld [vmem:[%s1 + $0xc] sm:$0xf]
  %v30 = vld [vmem:[%s1 + $0x10] sm:$0xf]
  %v31 = vld [vmem:[%s1 + $0x14] sm:$0xf]
  %v32 = vld [vmem:[%s1 + $0x18] sm:$0xf]
  %v33 = vld [vmem:[%s1 + $0x1c] sm:$0xf]
  %v34 = vld [vmem:[%s1 + $0x20] sm:$0xf]
  %v35 = vld [vmem:[%s1 + $0x24] sm:$0xf]
  %v36 = vld [vmem:[%s1 + $0x28] sm:$0xf]
  %v37 = vld [vmem:[%s1 + $0x2c] sm:$0xf]
  %v38 = vld [vmem:[%s1 + $0x30] sm:$0xf]
  %v39 = vld [vmem:[%s1 + $0x34] sm:$0xf]
  %v40 = vld [vmem:[%s1 + $0x38] sm:$0xf]
  %v41 = vld [vmem:[%s1 + $0x3c] sm:$0xf]
  %v42 = vld [vmem:[%s1 + $0x40] sm:$0xf]
  %v43 = vld [vmem:[%s1 + $0x44] sm:$0xf]
  %v44 = vld [vmem:[%s1 + $0x48] sm:$0xf]
  %v45 = vld [vmem:[%s1 + $0x4c] sm:$0xf]
  %v46 = vld [vmem:[%s1 + $0x50] sm:$0xf]
  %v47 = vld [vmem:[%s1 + $0x54] sm:$0xf]
  %v48 = vld [vmem:[%s1 + $0x58] sm:$0xf]
  %v49 = vld [vmem:[%s1 + $0x5c] sm:$0xf]
  %v50 = vld [vmem:[%s1 + $0x60] sm:$0xf]
  %v51 = vld [vmem:[%s1 + $0x64] sm:$0xf]
  %v52 = vld [vmem:[%s1 + $0x68] sm:$0xf]
  %v53 = vld [vmem:[%s1 + $0x6c] sm:$0xf]
  %v54 = vld [vmem:[%s1 + $0x70] sm:$0xf]
  %v55 = vld [vmem:[%s1 + $0x74] sm:$0xf]
  %v56 = vld [vmem:[%s1 + $0x78] sm:$0xf]
  %v57 = vld [vmem:[%s1 + $0x7c] sm:$0xf]
  %v58 = vld [vmem:[%s2] sm:$0x1]
  %v60 = vlaneseq
  %v61 = vshrl.u32 %v60, 7
  %v62 = vsub.s32 0, %v61
  %v63 = vrot.slane %v58, %v62
  %v67 = vunpack.c.l.b16 %v24
  %v68 = vunpack.c.h.b16 %v24
  %v69 = vunpack.c.l.b16 %v25
  %v70 = vunpack.c.h.b16 %v25
  %v71 = vpack.c.b16 %v69, %v67
  %v72 = vpack.c.b16 %v70, %v68
  %v107 = vunpack.c.l.b16 %v26
  %v108 = vunpack.c.l.b16 %v27
  %v109 = vunpack.c.l.b16 %v28
  %v110 = vunpack.c.l.b16 %v29
  %v111 = vunpack.c.l.b16 %v30
  %v112 = vunpack.c.l.b16 %v31
  %v113 = vunpack.c.l.b16 %v32
  %v114 = vunpack.c.l.b16 %v33
  %v115 = vunpack.c.l.b16 %v34
  %v116 = vunpack.c.l.b16 %v35
  %v117 = vunpack.c.l.b16 %v36
  %v118 = vunpack.c.l.b16 %v37
  %v119 = vunpack.c.l.b16 %v38
  %v120 = vunpack.c.l.b16 %v39
  %v121 = vunpack.c.l.b16 %v40
  %v122 = vunpack.c.l.b16 %v41
  %v123 = vunpack.c.l.b16 %v42
  %v124 = vunpack.c.l.b16 %v43
  %v125 = vunpack.c.l.b16 %v44
  %v126 = vunpack.c.l.b16 %v45
  %v127 = vunpack.c.l.b16 %v46
  %v128 = vunpack.c.l.b16 %v47
  %v129 = vunpack.c.l.b16 %v48
  %v130 = vunpack.c.l.b16 %v49
  %v131 = vunpack.c.l.b16 %v50
  %v132 = vunpack.c.l.b16 %v51
  %v133 = vunpack.c.l.b16 %v52
  %v134 = vunpack.c.l.b16 %v53
  %v135 = vunpack.c.l.b16 %v54
  %v136 = vunpack.c.l.b16 %v55
  %v137 = vunpack.c.l.b16 %v56
  %v138 = vunpack.c.l.b16 %v57
  %v139 = vpack.c.b16 %v108, %v107
  %v140 = vpack.c.b16 %v110, %v109
  %v141 = vpack.c.b16 %v112, %v111
  %v142 = vpack.c.b16 %v114, %v113
  %v143 = vpack.c.b16 %v116, %v115
  %v144 = vpack.c.b16 %v118, %v117
  %v145 = vpack.c.b16 %v120, %v119
  %v146 = vpack.c.b16 %v122, %v121
  %v147 = vpack.c.b16 %v124, %v123
  %v148 = vpack.c.b16 %v126, %v125
  %v149 = vpack.c.b16 %v128, %v127
  %v150 = vpack.c.b16 %v130, %v129
  %v151 = vpack.c.b16 %v132, %v131
  %v152 = vpack.c.b16 %v134, %v133
  %v153 = vpack.c.b16 %v136, %v135
  %v154 = vpack.c.b16 %v138, %v137
  %171 = vmatprep.subr.bf16.mxu0 0
  %172 = vmatpush1.bf16.msra.mxu0 %v146
  %173 = vmatprep.subr.bf16.mxu0 0
  %174 = vmatpush1.bf16.msra.mxu0 %v145
  %175 = vmatprep.subr.bf16.mxu0 0
  %176 = vmatpush1.bf16.msra.mxu0 %v144
  %177 = vmatprep.subr.bf16.mxu0 0
  %178 = vmatpush1.bf16.msra.mxu0 %v143
  %179 = vmatprep.subr.bf16.mxu0 0
  %180 = vmatpush1.bf16.msra.mxu0 %v142
  %181 = vmatprep.subr.bf16.mxu0 0
  %182 = vmatpush1.bf16.msra.mxu0 %v141
  %183 = vmatprep.subr.bf16.mxu0 0
  %184 = vmatpush1.bf16.msra.mxu0 %v140
  %185 = vmatprep.subr.bf16.mxu0 0
  %186 = vmatpush1.bf16.msra.mxu0 %v139
  %187 = vmatprep.subr.bf16.mxu0 0
  %188 = vmatpush2.bf16.msra.mxu0 %v154
  %189 = vmatprep.subr.bf16.mxu0 0
  %190 = vmatpush2.bf16.msra.mxu0 %v153
  %191 = vmatprep.subr.bf16.mxu0 0
  %192 = vmatpush2.bf16.msra.mxu0 %v152
  %193 = vmatprep.subr.bf16.mxu0 0
  %194 = vmatpush2.bf16.msra.mxu0 %v151
  %195 = vmatprep.subr.bf16.mxu0 0
  %196 = vmatpush2.bf16.msra.mxu0 %v150
  %197 = vmatprep.subr.bf16.mxu0 0
  %198 = vmatpush2.bf16.msra.mxu0 %v149
  %199 = vmatprep.subr.bf16.mxu0 0
  %200 = vmatpush2.bf16.msra.mxu0 %v148
  %201 = vmatprep.subr.bf16.mxu0 0
  %202 = vmatpush2.bf16.msra.mxu0 %v147
  %203 = vmatprep.mubr.bf16.mxu0 %v72
  %204 = vmatmul.mubr.bf16.gmra.mxu0 %v71
  %v205 = vpop.f32.mrf.mxu0
  %v206 = vadd.f32 %v63, %v205
  %v207 = vpop.f32.mrf.mxu0
  %v208 = vpop.f32.mrf.mxu0
  %v209 = vadd.f32 %v63, %v208
  %v210 = vpop.f32.mrf.mxu0
  %211 = vdwg.mxu0
  %v212 = vld [vmem:[%s3] sm:$0xf]
  %v213 = vld [vmem:[%s3 + $0x4] sm:$0xf]
  %v214 = vunpack.c.l.bf16 %v212
  %v215 = vunpack.c.l.bf16 %v213
  %v216 = vadd.f32 %v206, %v214
  %v217 = vadd.f32 %v209, %v215
  %218 = vadd.xlane.f32.xlu0 %v216
  %v219 = vpop.xlane.xlu0 %218
  %220 = vadd.xlane.f32.xlu0 %v217
  %v221 = vpop.xlane.xlu0 %220
  %v222 = vrcp.pop 128.0
  %v223 = vmul.f32 %v219, %v222
  %v224 = vmul.f32 %v221, %v222
  %v225 = vsub.f32 %v216, %v223
  %v226 = vsub.f32 %v217, %v224
  %v227 = vmul.f32 %v225, %v225
  %v228 = vmul.f32 %v226, %v226
  %229 = vadd.xlane.f32.xlu0 %v227
  %v230 = vpop.xlane.xlu0 %229
  %231 = vadd.xlane.f32.xlu0 %v228
  %v232 = vpop.xlane.xlu0 %231
  %v233 = vmul.f32 %v230, %v222
  %v234 = vmul.f32 %v232, %v222
  %v235 = vadd.f32 %v233, 1e-12
  %v236 = vadd.f32 %v234, 1e-12
  %v237 = vrsqrt.pop %v235
  %v238 = vrsqrt.pop %v236
  %v239 = vmul.f32 %v225, %v237
  %v240 = vmul.f32 %v226, %v238
  %v241 = vld [vmem:[%s4] sm:$0x1]
  %v243 = vlaneseq
  %v244 = vshrl.u32 %v243, 7
  %v245 = vsub.s32 0, %v244
  %v246 = vrot.slane %v241, %v245
  %v248 = vmul.f32 %v239, %v246
  %v249 = vmul.f32 %v240, %v246
  %v250 = vld [vmem:[%s5] sm:$0x1]
  %v252 = vlaneseq
  %v253 = vshrl.u32 %v252, 7
  %v254 = vsub.s32 0, %v253
  %v255 = vrot.slane %v250, %v254
  %v257 = vadd.f32 %v248, %v255
  %v258 = vadd.f32 %v249, %v255
  %v259 = vpack.c.bf16 %v258, %v257
  %v261 = vunpack.c.l.b16 %v259
  %v262 = vunpack.c.h.b16 %v259
  %v263 = vpack.c.b16 %v261, %v261
  %v264 = vpack.c.b16 %v262, %v262
  %267 = vst [vmem:[%s6] sm:$0xf] %v263
  %268 = vst [vmem:[%s6 + $0x4] sm:$0xf] %v264
  // Predicated region
  $region26: #{bert_forward.16} parent=0 // pred_check
    _
  $region27: #{bert_forward.16} parent=0 // pred_check_branch
    %270 = sbr.rel (0) target = $region29
  $region28: #{bert_forward.16} parent=0 // pred_region
    _
  $region29: #{bert_forward.16} parent=0 // pred_fallthru
    _
  // Predicated region
  $region30: #{bert_forward.16} parent=0 // pred_check
    _
  $region31: #{bert_forward.16} parent=0 // pred_check_branch
    %272 = sbr.rel (0) target = $region33
  $region32: #{bert_forward.16} parent=0 // pred_region
    _
  $region33: #{bert_forward.16} parent=0 // pred_fallthru
    _

</llo_original>
